<compile_context>
chip_gen: v6e
topology: v6e:2x2x1
jax: 0.10.0
libtpu: 0.0.40
codegen_flags: <defaults>
</compile_context>

<pallas_src>
import functools

import numpy as np
import jax
import jax.numpy as jnp
from jax import lax
from jax.experimental import pallas as pl
from jax.experimental.pallas import tpu as pltpu


# --------------------------------- kernel ----------------------------------

def formula_net_kernel(st_ref, batch_ref, x_ref, ea_ref,
                       W1_ref, WE_ref, v1_ref, W2_ref, v2_ref,
                       fW_ref, fv_ref, out_ref, *,
                       num_iterations, num_graphs):
    E2 = st_ref.shape[0]
    E = E2 // 2
    N, D = x_ref.shape
    D2 = 2 * D
    f32 = jnp.float32
    bf16 = jnp.bfloat16

    # ---- single stacked one-hot operand (exact 0/1 in bf16, hoisted) -------
    #   rows 0:E  -> one-hot of dst[e]   (parent gather / parent scatter)
    #   rows E:2E -> one-hot of src[e]   (child  gather / child  scatter)
    node_iota = lax.broadcasted_iota(jnp.int32, (E2, N), 1)
    st_mask = st_ref[...] == node_iota              # [2E, N] bool
    ST16 = st_mask.astype(bf16)                     # only persistent O(E*N) array

    # Degrees as lane rows via a column reduce with f32 accumulation.
    deg_dst = jnp.sum(ST16[0:E, :], axis=0, keepdims=True, dtype=f32)   # [1, N]
    deg_src = jnp.sum(ST16[E:E2, :], axis=0, keepdims=True, dtype=f32)
    inv_dst = jnp.where(deg_dst > 0, 1.0 / jnp.maximum(deg_dst, 1.0), 0.0)
    inv_src = jnp.where(deg_src > 0, 1.0 / jnp.maximum(deg_src, 1.0), 0.0)
    # Per-edge inverse degree, f32, hoisted (iteration-invariant).
    inv_dst_e = jnp.sum(jnp.where(st_mask[0:E, :], inv_dst, 0.0),
                        axis=1, keepdims=True)                          # [E, 1]
    inv_src_e = jnp.sum(jnp.where(st_mask[E:E2, :], inv_src, 0.0),
                        axis=1, keepdims=True)                          # [E, 1]

    # ---- fused parent/child edge-MLP weights (lane-stacked), cast once -----
    W116 = W1_ref[...].astype(bf16)     # [2D, 2D] rows 0:D -> x_dst, D:2D -> x_src
    WE16 = WE_ref[...].astype(bf16)     # [ED, 2D]
    W216 = W2_ref[...].astype(bf16)     # [2D, 2D] block-diagonal second linear
    fW16 = fW_ref[...].astype(bf16)     # [D , D ] CombinedAggregation linear
    v1 = v1_ref[...]                    # [3, 2D]  rows: bias, BN gamma, BN beta
    v2 = v2_ref[...]                    # [3, 2D]
    fv = fv_ref[...]                    # [3, D ]

    # edge_attr contribution + first bias are iteration-invariant -> hoist.
    ea_term = jnp.dot(ea_ref[...].astype(bf16), WE16,
                      preferred_element_type=f32) + v1[0:1, :]          # [E, 2D]

    def bn_relu(h, v, eps=1e-5):
        # Single-pass BatchNorm1d (training mode, biased batch var) + ReLU, f32.
        mu = jnp.mean(h, axis=0, keepdims=True)
        var = jnp.maximum(jnp.mean(h * h, axis=0, keepdims=True) - mu * mu, 0.0)
        scale = v[1:2, :] * lax.rsqrt(var + eps)
        return jnp.maximum(h * scale + (v[2:3, :] - mu * scale), 0.0)

    contract_e = (((0,), (0,)), ((), ()))   # contract over the stacked edge dim

    def body(_, nodes):
        nodes16 = nodes.astype(bf16)
        # Fused gather: one matmul; rows 0:E = x[dst], rows E:2E = x[src].
        g = jnp.dot(ST16, nodes16, preferred_element_type=f32)          # [2E, D]
        gcat = jnp.concatenate([g[0:E, :], g[E:E2, :]], axis=1).astype(bf16)
        # Fused parent/child edge MLP (lane-stacked, block-diag second linear).
        h = jnp.dot(gcat, W116, preferred_element_type=f32) + ea_term   # [E, 2D]
        h = bn_relu(h, v1)
        h = jnp.dot(h.astype(bf16), W216,
                    preferred_element_type=f32) + v2[0:1, :]
        h = bn_relu(h, v2)
        # Degree normalization in f32 per edge, then ONE fused scatter matmul
        # (contraction depth 2E) producing fi + fo directly.
        msgP = (h[:, 0:D] * inv_dst_e).astype(bf16)                     # [E, D]
        msgC = (h[:, D:D2] * inv_src_e).astype(bf16)                    # [E, D]
        M = jnp.concatenate([msgP, msgC], axis=0)                       # [2E, D]
        fio = lax.dot_general(ST16, M, contract_e,
                              preferred_element_type=f32)               # [N, D]
        # CombinedAggregation: Linear + BN + ReLU, residual add.
        comb = nodes + fio
        u = jnp.dot(comb.astype(bf16), fW16,
                    preferred_element_type=f32) + fv[0:1, :]
        return nodes + bn_relu(u, fv)

    nodes = lax.fori_loop(0, num_iterations, body, x_ref[...].astype(f32),
                          unroll=bool(num_iterations <= 3))

    # global_max_pool(nodes, batch): finite sentinel, one full-block store.
    batch_col = batch_ref[...]                       # [N, 1] int32
    neg = jnp.finfo(f32).min
    rows = []
    for g_ix in range(num_graphs):
        rows.append(jnp.max(jnp.where(batch_col == g_ix, nodes, neg),
                            axis=0, keepdims=True))
    out_ref[...] = jnp.concatenate(rows, axis=0)


# -------------------------------- wrapper -----------------------------------

def _fuse_params(params, D):
    """Lane-stack parent/child edge-MLP weights for the fused kernel."""
    pW1, cW1 = params["pW1"], params["cW1"]
    # parent input = [x_dst, x_src, ea] ; child input = [x_src, x_dst, ea]
    WA = jnp.concatenate([pW1[0:D, :], cW1[D:2 * D, :]], axis=1)    # x[dst] rows
    WB = jnp.concatenate([pW1[D:2 * D, :], cW1[0:D, :]], axis=1)    # x[src] rows
    W1s = jnp.concatenate([WA, WB], axis=0)                         # [2D, 2D]
    WE = jnp.concatenate([pW1[2 * D:, :], cW1[2 * D:, :]], axis=1)  # edge_attr
    v1 = jnp.concatenate([params["pv1"], params["cv1"]], axis=1)    # [3, 2D]
    zero = jnp.zeros((D, D), jnp.float32)
    W2 = jnp.concatenate(
        [jnp.concatenate([params["pW2"], zero], axis=1),
         jnp.concatenate([zero, params["cW2"]], axis=1)], axis=0)   # [2D, 2D]
    v2 = jnp.concatenate([params["pv2"], params["cv2"]], axis=1)    # [3, 2D]
    return W1s, WE, v1, W2, v2


def _vmem_capacity_bytes():
    """Generation-aware physical VMEM size (fallback: conservative 64 MiB)."""
    try:
        info = pltpu.get_tpu_info()
        for attr in ("vmem_capacity_bytes", "vmem_bytes", "vmem_size_bytes"):
            v = getattr(info, attr, None)
            if v:
                return int(v)
    except Exception:
        pass
    return 64 * 1024 * 1024


def formula_net_edges_forward(params, x_ids, edge_index, edge_attr_ids,
                              batch_ids, *, num_iterations, num_graphs):
    # Embedding lookups (initial_encoder / edge_encoder) = gather glue in JAX.
    nodes0 = params["node_emb"][x_ids]                    # [N, D]
    ea = params["edge_emb"][edge_attr_ids]                # [E, ED]
    N, D = nodes0.shape
    E, ED = ea.shape

    src = edge_index[0].astype(jnp.int32)
    dst = edge_index[1].astype(jnp.int32)
    # Stacked edge-node indices: rows 0:E = dst, rows E:2E = src.
    st_idx = jnp.concatenate([dst, src], axis=0).reshape(2 * E, 1)
    batch_col = batch_ids.astype(jnp.int32).reshape(N, 1)

    W1s, WE, v1, W2, v2 = _fuse_params(params, D)
    inputs = (st_idx, batch_col, nodes0, ea, W1s, WE, v1, W2, v2,
              params["fW"], params["fv"])

    # Rough resident-set estimate (stacked one-hot, prologue transients,
    # edge-MLP intermediates, node intermediates, weights) + headroom.
    est = (2 * E * N * 2             # stacked bf16 one-hot  [2E, N]
           + 2 * E * N               # bool stacked mask
           + 4 * E * N               # hoisted f32 [E,N] select transient
           + 6 * E * 2 * D * 4       # ea_term + live edge-MLP intermediates
           + 4 * 2 * E * D * 4       # gather / message stacks
           + 8 * N * D * 4           # node intermediates
           + E * ED * 4
           + (2 * (2 * D) * (2 * D) + ED * 2 * D + D * D) * 4)
    cap = _vmem_capacity_bytes()
    vmem_limit = int(min(max(3 * est, 32 * 1024 * 1024), int(0.72 * cap)))

    vmem = pl.BlockSpec(memory_space=pltpu.MemorySpace.VMEM)
    kernel = functools.partial(formula_net_kernel,
                               num_iterations=num_iterations,
                               num_graphs=num_graphs)
    return pl.pallas_call(
        kernel,
        out_shape=jax.ShapeDtypeStruct((num_graphs, D), jnp.float32),
        in_specs=[vmem] * len(inputs),
        out_specs=vmem,
        compiler_params=pltpu.CompilerParams(vmem_limit_bytes=vmem_limit),
    )(*inputs)


# --------------------------- deterministic params ---------------------------

def init_params(key, vocab, max_edges, D, ED):
    keys = jax.random.split(key, 10)

    def linear(k, fan_in, fan_out):
        lim = 1.0 / np.sqrt(fan_in)
        kw, kb = jax.random.split(k)
        W = jax.random.uniform(kw, (fan_in, fan_out), jnp.float32, -lim, lim)
        b = jax.random.uniform(kb, (fan_out,), jnp.float32, -lim, lim)
        return W, b

    def bn_pack(bias):
        # rows: [linear bias, BN gamma (=1), BN beta (=0)]
        return jnp.stack([bias,
                          jnp.ones((D,), jnp.float32),
                          jnp.zeros((D,), jnp.float32)], axis=0)

    p = {}
    p["node_emb"] = jax.random.normal(keys[0], (vocab, D), jnp.float32)
    p["edge_emb"] = jax.random.normal(keys[1], (max_edges, ED), jnp.float32)
    for prefix, ko in (("p", 2), ("c", 4)):
        W1, b1 = linear(keys[ko], 2 * D + ED, D)
        W2, b2 = linear(keys[ko + 1], D, D)
        p[prefix + "W1"] = W1
        p[prefix + "v1"] = bn_pack(b1)
        p[prefix + "W2"] = W2
        p[prefix + "v2"] = bn_pack(b2)
    Wf, bf = linear(keys[6], D, D)
    p["fW"] = Wf
    p["fv"] = bn_pack(bf)
    return p


# ------------------------- pure-JAX reference check -------------------------

def reference_forward(params, x_ids, edge_index, edge_attr_ids, batch_ids,
                      num_iterations, num_graphs):
    nodes = params["node_emb"][x_ids]
    ea = params["edge_emb"][edge_attr_ids]
    N, D = nodes.shape
    src, dst = edge_index[0], edge_index[1]

    def bn(h, gamma, beta, eps=1e-5):
        mu = h.mean(0, keepdims=True)
        var = ((h - mu) ** 2).mean(0, keepdims=True)
        return (h - mu) / jnp.sqrt(var + eps) * gamma + beta

    def mlp2(z, W1, v1, W2, v2):
        h = jax.nn.relu(bn(z @ W1 + v1[0], v1[1], v1[2]))
        return jax.nn.relu(bn(h @ W2 + v2[0], v2[1], v2[2]))

    deg_dst = jnp.zeros((N,)).at[dst].add(1.0)
    deg_src = jnp.zeros((N,)).at[src].add(1.0)
    inv_dst = jnp.where(deg_dst > 0, 1.0 / deg_dst, 0.0)[:, None]
    inv_src = jnp.where(deg_src > 0, 1.0 / deg_src, 0.0)[:, None]

    for _ in range(num_iterations):
        x_src, x_dst = nodes[src], nodes[dst]
        msg_p = mlp2(jnp.concatenate([x_dst, x_src, ea], 1),
                     params["pW1"], params["pv1"], params["pW2"], params["pv2"])
        fi = jnp.zeros((N, D)).at[dst].add(msg_p) * inv_dst
        msg_c = mlp2(jnp.concatenate([x_src, x_dst, ea], 1),
                     params["cW1"], params["cv1"], params["cW2"], params["cv2"])
        fo = jnp.zeros((N, D)).at[src].add(msg_c) * inv_src
        comb = nodes + fi + fo
        upd = jax.nn.relu(bn(comb @ params["fW"] + params["fv"][0],
                             params["fv"][1], params["fv"][2]))
        nodes = nodes + upd

    neg = jnp.finfo(jnp.float32).min
    pooled = []
    for g in range(num_graphs):
        mask = (batch_ids == g)[:, None]
        pooled.append(jnp.max(jnp.where(mask, nodes, neg), axis=0))
    return jnp.stack(pooled)


# ----------------------------------- main ------------------------------------

if __name__ == "__main__":
    vocab, max_edges = 50, 200           # input_shape, max_edges
    D, ED = 32, 32                       # embedding_dim, edge_dim
    N, E, G = 16, 32, 2                  # nodes, edges, graphs in batch
    num_iterations = 2

    params = init_params(jax.random.PRNGKey(0), vocab, max_edges, D, ED)

    k1, k2, k3, k4 = jax.random.split(jax.random.PRNGKey(0), 4)
    x_ids = jax.random.randint(k1, (N,), 0, vocab, dtype=jnp.int32)
    src = jax.random.randint(k2, (E,), 0, N, dtype=jnp.int32)
    dst = jax.random.randint(k3, (E,), 0, N, dtype=jnp.int32)
    edge_index = jnp.stack([src, dst], axis=0)            # [2, E]
    edge_attr = jax.random.randint(k4, (E,), 0, max_edges, dtype=jnp.int32)
    batch_ids = jnp.concatenate([jnp.zeros((N // 2,), jnp.int32),
                                 jnp.ones((N - N // 2,), jnp.int32)])

    out = formula_net_edges_forward(params, x_ids, edge_index, edge_attr,
                                    batch_ids, num_iterations=num_iterations,
                                    num_graphs=G)
    out = jax.block_until_ready(out)

    ref = reference_forward(params, x_ids, edge_index, edge_attr, batch_ids,
                            num_iterations, G)
    # bf16 MXU operands vs pure-f32 reference: a few % tolerance.
    np.testing.assert_allclose(np.asarray(out), np.asarray(ref),
                               rtol=5e-2, atol=5e-2)
    print("KERNEL_OK")
</pallas_src>

<mosaic_0001>
module attributes {stable_mosaic.version = 11 : i64} {
  func.func @formula_net_kernel(%arg0: memref<64x1xi32, #tpu.memory_space<vmem>>, %arg1: memref<16x1xi32, #tpu.memory_space<vmem>>, %arg2: memref<16x32xf32, #tpu.memory_space<vmem>>, %arg3: memref<32x32xf32, #tpu.memory_space<vmem>>, %arg4: memref<64x64xf32, #tpu.memory_space<vmem>>, %arg5: memref<32x64xf32, #tpu.memory_space<vmem>>, %arg6: memref<3x64xf32, #tpu.memory_space<vmem>>, %arg7: memref<64x64xf32, #tpu.memory_space<vmem>>, %arg8: memref<3x64xf32, #tpu.memory_space<vmem>>, %arg9: memref<32x32xf32, #tpu.memory_space<vmem>>, %arg10: memref<3x32xf32, #tpu.memory_space<vmem>>, %arg11: memref<2x32xf32, #tpu.memory_space<vmem>>) attributes {dimension_semantics = [], scalar_prefetch = 0 : i64, scratch_operands = 0 : i64, tpu.core_type = #tpu.core_type<tc>} {
    %0 = tpu.iota {dimensions = array<i32: 1>} : vector<64x16xi32>
    %c0 = arith.constant 0 : index
    %c0_0 = arith.constant 0 : index
    %1 = vector.load %arg0[%c0, %c0_0] : memref<64x1xi32, #tpu.memory_space<vmem>>, vector<64x1xi32>
    %2 = vector.broadcast %1 : vector<64x1xi32> to vector<64x16xi32>
    %3 = arith.cmpi eq, %2, %0 : vector<64x16xi32>
    %4 = arith.extui %3 : vector<64x16xi1> to vector<64x16xi32>
    %5 = arith.sitofp %4 : vector<64x16xi32> to vector<64x16xf32>
    %6 = arith.truncf %5 : vector<64x16xf32> to vector<64x16xbf16>
    %7 = vector.extract_strided_slice %6 {offsets = [0, 0], sizes = [32, 16], strides = [1, 1]} : vector<64x16xbf16> to vector<32x16xbf16>
    %8 = arith.extf %7 : vector<32x16xbf16> to vector<32x16xf32>
    %cst = arith.constant dense<0.000000e+00> : vector<16xf32>
    %9 = vector.multi_reduction <add>, %8, %cst [0] : vector<32x16xf32> to vector<16xf32>
    %10 = vector.shape_cast %9 : vector<16xf32> to vector<1x16xf32>
    %11 = vector.extract_strided_slice %6 {offsets = [32, 0], sizes = [32, 16], strides = [1, 1]} : vector<64x16xbf16> to vector<32x16xbf16>
    %12 = arith.extf %11 : vector<32x16xbf16> to vector<32x16xf32>
    %cst_1 = arith.constant dense<0.000000e+00> : vector<16xf32>
    %13 = vector.multi_reduction <add>, %12, %cst_1 [0] : vector<32x16xf32> to vector<16xf32>
    %14 = vector.shape_cast %13 : vector<16xf32> to vector<1x16xf32>
    %cst_2 = arith.constant 0.000000e+00 : f32
    %15 = vector.broadcast %cst_2 : f32 to vector<1x16xf32>
    %16 = arith.cmpf ogt, %10, %15 : vector<1x16xf32>
    %cst_3 = arith.constant 1.000000e+00 : f32
    %17 = vector.broadcast %cst_3 : f32 to vector<1x16xf32>
    %18 = arith.maximumf %10, %17 : vector<1x16xf32>
    %cst_4 = arith.constant 1.000000e+00 : f32
    %19 = vector.broadcast %cst_4 : f32 to vector<1x16xf32>
    %20 = arith.divf %19, %18 : vector<1x16xf32>
    %cst_5 = arith.constant 0.000000e+00 : f32
    %21 = vector.broadcast %cst_5 : f32 to vector<1x16xf32>
    %22 = arith.select %16, %20, %21 : vector<1x16xi1>, vector<1x16xf32>
    %cst_6 = arith.constant 0.000000e+00 : f32
    %23 = vector.broadcast %cst_6 : f32 to vector<1x16xf32>
    %24 = arith.cmpf ogt, %14, %23 : vector<1x16xf32>
    %cst_7 = arith.constant 1.000000e+00 : f32
    %25 = vector.broadcast %cst_7 : f32 to vector<1x16xf32>
    %26 = arith.maximumf %14, %25 : vector<1x16xf32>
    %cst_8 = arith.constant 1.000000e+00 : f32
    %27 = vector.broadcast %cst_8 : f32 to vector<1x16xf32>
    %28 = arith.divf %27, %26 : vector<1x16xf32>
    %cst_9 = arith.constant 0.000000e+00 : f32
    %29 = vector.broadcast %cst_9 : f32 to vector<1x16xf32>
    %30 = arith.select %24, %28, %29 : vector<1x16xi1>, vector<1x16xf32>
    %31 = vector.extract_strided_slice %3 {offsets = [0, 0], sizes = [32, 16], strides = [1, 1]} : vector<64x16xi1> to vector<32x16xi1>
    %cst_10 = arith.constant 0.000000e+00 : f32
    %32 = vector.shape_cast %22 : vector<1x16xf32> to vector<1x16xf32>
    %33 = vector.broadcast %32 : vector<1x16xf32> to vector<32x16xf32>
    %34 = vector.broadcast %cst_10 : f32 to vector<32x16xf32>
    %35 = arith.select %31, %33, %34 : vector<32x16xi1>, vector<32x16xf32>
    %cst_11 = arith.constant dense<0.000000e+00> : vector<32xf32>
    %36 = vector.multi_reduction <add>, %35, %cst_11 [1] : vector<32x16xf32> to vector<32xf32>
    %37 = vector.shape_cast %36 : vector<32xf32> to vector<32x1xf32>
    %38 = vector.extract_strided_slice %3 {offsets = [32, 0], sizes = [32, 16], strides = [1, 1]} : vector<64x16xi1> to vector<32x16xi1>
    %cst_12 = arith.constant 0.000000e+00 : f32
    %39 = vector.shape_cast %30 : vector<1x16xf32> to vector<1x16xf32>
    %40 = vector.broadcast %39 : vector<1x16xf32> to vector<32x16xf32>
    %41 = vector.broadcast %cst_12 : f32 to vector<32x16xf32>
    %42 = arith.select %38, %40, %41 : vector<32x16xi1>, vector<32x16xf32>
    %cst_13 = arith.constant dense<0.000000e+00> : vector<32xf32>
    %43 = vector.multi_reduction <add>, %42, %cst_13 [1] : vector<32x16xf32> to vector<32xf32>
    %44 = vector.shape_cast %43 : vector<32xf32> to vector<32x1xf32>
    %c0_14 = arith.constant 0 : index
    %c0_15 = arith.constant 0 : index
    %45 = vector.load %arg4[%c0_14, %c0_15] : memref<64x64xf32, #tpu.memory_space<vmem>>, vector<64x64xf32>
    %46 = arith.truncf %45 : vector<64x64xf32> to vector<64x64xbf16>
    %c0_16 = arith.constant 0 : index
    %c0_17 = arith.constant 0 : index
    %47 = vector.load %arg5[%c0_16, %c0_17] : memref<32x64xf32, #tpu.memory_space<vmem>>, vector<32x64xf32>
    %48 = arith.truncf %47 : vector<32x64xf32> to vector<32x64xbf16>
    %c0_18 = arith.constant 0 : index
    %c0_19 = arith.constant 0 : index
    %49 = vector.load %arg7[%c0_18, %c0_19] : memref<64x64xf32, #tpu.memory_space<vmem>>, vector<64x64xf32>
    %50 = arith.truncf %49 : vector<64x64xf32> to vector<64x64xbf16>
    %c0_20 = arith.constant 0 : index
    %c0_21 = arith.constant 0 : index
    %51 = vector.load %arg9[%c0_20, %c0_21] : memref<32x32xf32, #tpu.memory_space<vmem>>, vector<32x32xf32>
    %52 = arith.truncf %51 : vector<32x32xf32> to vector<32x32xbf16>
    %c0_22 = arith.constant 0 : index
    %c0_23 = arith.constant 0 : index
    %53 = vector.load %arg6[%c0_22, %c0_23] : memref<3x64xf32, #tpu.memory_space<vmem>>, vector<3x64xf32>
    %c0_24 = arith.constant 0 : index
    %c0_25 = arith.constant 0 : index
    %54 = vector.load %arg8[%c0_24, %c0_25] : memref<3x64xf32, #tpu.memory_space<vmem>>, vector<3x64xf32>
    %c0_26 = arith.constant 0 : index
    %c0_27 = arith.constant 0 : index
    %55 = vector.load %arg10[%c0_26, %c0_27] : memref<3x32xf32, #tpu.memory_space<vmem>>, vector<3x32xf32>
    %c0_28 = arith.constant 0 : index
    %c0_29 = arith.constant 0 : index
    %56 = vector.load %arg3[%c0_28, %c0_29] : memref<32x32xf32, #tpu.memory_space<vmem>>, vector<32x32xf32>
    %57 = arith.truncf %56 : vector<32x32xf32> to vector<32x32xbf16>
    %cst_30 = arith.constant dense<0.000000e+00> : vector<32x64xf32>
    %58 = tpu.matmul %57, %48, %cst_30 {dimension_numbers = #tpu.dot_dimension_numbers<[1], [0], [0], [1], [0, 0, 1, 1], [], []>} : vector<32x32xbf16>, vector<32x64xbf16>, vector<32x64xf32> -> vector<32x64xf32>
    %59 = vector.extract_strided_slice %53 {offsets = [0, 0], sizes = [1, 64], strides = [1, 1]} : vector<3x64xf32> to vector<1x64xf32>
    %60 = vector.broadcast %59 : vector<1x64xf32> to vector<32x64xf32>
    %61 = arith.addf %58, %60 : vector<32x64xf32>
    %c0_31 = arith.constant 0 : index
    %c0_32 = arith.constant 0 : index
    %62 = vector.load %arg2[%c0_31, %c0_32] : memref<16x32xf32, #tpu.memory_space<vmem>>, vector<16x32xf32>
    %c0_i32 = arith.constant 0 : i32
    %63 = arith.truncf %62 : vector<16x32xf32> to vector<16x32xbf16>
    %cst_33 = arith.constant dense<0.000000e+00> : vector<64x32xf32>
    %64 = tpu.matmul %6, %63, %cst_33 {dimension_numbers = #tpu.dot_dimension_numbers<[1], [0], [0], [1], [0, 0, 1, 1], [], []>} : vector<64x16xbf16>, vector<16x32xbf16>, vector<64x32xf32> -> vector<64x32xf32>
    %65 = vector.extract_strided_slice %64 {offsets = [0, 0], sizes = [32, 32], strides = [1, 1]} : vector<64x32xf32> to vector<32x32xf32>
    %66 = vector.extract_strided_slice %64 {offsets = [32, 0], sizes = [32, 32], strides = [1, 1]} : vector<64x32xf32> to vector<32x32xf32>
    %67 = tpu.concatenate %65, %66 in 1 : vector<32x32xf32>, vector<32x32xf32> -> vector<32x64xf32>
    %68 = arith.truncf %67 : vector<32x64xf32> to vector<32x64xbf16>
    %cst_34 = arith.constant dense<0.000000e+00> : vector<32x64xf32>
    %69 = tpu.matmul %68, %46, %cst_34 {dimension_numbers = #tpu.dot_dimension_numbers<[1], [0], [0], [1], [0, 0, 1, 1], [], []>} : vector<32x64xbf16>, vector<64x64xbf16>, vector<32x64xf32> -> vector<32x64xf32>
    %70 = arith.addf %69, %61 : vector<32x64xf32>
    %cst_35 = arith.constant dense<0.000000e+00> : vector<64xf32>
    %71 = vector.multi_reduction <add>, %70, %cst_35 [0] : vector<32x64xf32> to vector<64xf32>
    %72 = vector.shape_cast %71 : vector<64xf32> to vector<1x64xf32>
    %cst_36 = arith.constant 3.200000e+01 : f32
    %73 = vector.broadcast %cst_36 : f32 to vector<1x64xf32>
    %74 = arith.divf %72, %73 : vector<1x64xf32>
    %75 = arith.mulf %70, %70 : vector<32x64xf32>
    %cst_37 = arith.constant dense<0.000000e+00> : vector<64xf32>
    %76 = vector.multi_reduction <add>, %75, %cst_37 [0] : vector<32x64xf32> to vector<64xf32>
    %77 = vector.shape_cast %76 : vector<64xf32> to vector<1x64xf32>
    %cst_38 = arith.constant 3.200000e+01 : f32
    %78 = vector.broadcast %cst_38 : f32 to vector<1x64xf32>
    %79 = arith.divf %77, %78 : vector<1x64xf32>
    %80 = arith.mulf %74, %74 : vector<1x64xf32>
    %81 = arith.subf %79, %80 : vector<1x64xf32>
    %cst_39 = arith.constant 0.000000e+00 : f32
    %82 = vector.broadcast %cst_39 : f32 to vector<1x64xf32>
    %83 = arith.maximumf %81, %82 : vector<1x64xf32>
    %84 = vector.extract_strided_slice %53 {offsets = [1, 0], sizes = [1, 64], strides = [1, 1]} : vector<3x64xf32> to vector<1x64xf32>
    %cst_40 = arith.constant 9.99999974E-6 : f32
    %85 = vector.broadcast %cst_40 : f32 to vector<1x64xf32>
    %86 = arith.addf %83, %85 : vector<1x64xf32>
    %87 = math.rsqrt %86 : vector<1x64xf32>
    %88 = arith.mulf %84, %87 : vector<1x64xf32>
    %89 = vector.broadcast %88 : vector<1x64xf32> to vector<32x64xf32>
    %90 = arith.mulf %70, %89 : vector<32x64xf32>
    %91 = vector.extract_strided_slice %53 {offsets = [2, 0], sizes = [1, 64], strides = [1, 1]} : vector<3x64xf32> to vector<1x64xf32>
    %92 = arith.mulf %74, %88 : vector<1x64xf32>
    %93 = arith.subf %91, %92 : vector<1x64xf32>
    %94 = vector.broadcast %93 : vector<1x64xf32> to vector<32x64xf32>
    %95 = arith.addf %90, %94 : vector<32x64xf32>
    %cst_41 = arith.constant 0.000000e+00 : f32
    %96 = vector.broadcast %cst_41 : f32 to vector<32x64xf32>
    %97 = arith.maximumf %95, %96 : vector<32x64xf32>
    %98 = arith.truncf %97 : vector<32x64xf32> to vector<32x64xbf16>
    %cst_42 = arith.constant dense<0.000000e+00> : vector<32x64xf32>
    %99 = tpu.matmul %98, %50, %cst_42 {dimension_numbers = #tpu.dot_dimension_numbers<[1], [0], [0], [1], [0, 0, 1, 1], [], []>} : vector<32x64xbf16>, vector<64x64xbf16>, vector<32x64xf32> -> vector<32x64xf32>
    %100 = vector.extract_strided_slice %54 {offsets = [0, 0], sizes = [1, 64], strides = [1, 1]} : vector<3x64xf32> to vector<1x64xf32>
    %101 = vector.broadcast %100 : vector<1x64xf32> to vector<32x64xf32>
    %102 = arith.addf %99, %101 : vector<32x64xf32>
    %cst_43 = arith.constant dense<0.000000e+00> : vector<64xf32>
    %103 = vector.multi_reduction <add>, %102, %cst_43 [0] : vector<32x64xf32> to vector<64xf32>
    %104 = vector.shape_cast %103 : vector<64xf32> to vector<1x64xf32>
    %cst_44 = arith.constant 3.200000e+01 : f32
    %105 = vector.broadcast %cst_44 : f32 to vector<1x64xf32>
    %106 = arith.divf %104, %105 : vector<1x64xf32>
    %107 = arith.mulf %102, %102 : vector<32x64xf32>
    %cst_45 = arith.constant dense<0.000000e+00> : vector<64xf32>
    %108 = vector.multi_reduction <add>, %107, %cst_45 [0] : vector<32x64xf32> to vector<64xf32>
    %109 = vector.shape_cast %108 : vector<64xf32> to vector<1x64xf32>
    %cst_46 = arith.constant 3.200000e+01 : f32
    %110 = vector.broadcast %cst_46 : f32 to vector<1x64xf32>
    %111 = arith.divf %109, %110 : vector<1x64xf32>
    %112 = arith.mulf %106, %106 : vector<1x64xf32>
    %113 = arith.subf %111, %112 : vector<1x64xf32>
    %cst_47 = arith.constant 0.000000e+00 : f32
    %114 = vector.broadcast %cst_47 : f32 to vector<1x64xf32>
    %115 = arith.maximumf %113, %114 : vector<1x64xf32>
    %116 = vector.extract_strided_slice %54 {offsets = [1, 0], sizes = [1, 64], strides = [1, 1]} : vector<3x64xf32> to vector<1x64xf32>
    %cst_48 = arith.constant 9.99999974E-6 : f32
    %117 = vector.broadcast %cst_48 : f32 to vector<1x64xf32>
    %118 = arith.addf %115, %117 : vector<1x64xf32>
    %119 = math.rsqrt %118 : vector<1x64xf32>
    %120 = arith.mulf %116, %119 : vector<1x64xf32>
    %121 = vector.broadcast %120 : vector<1x64xf32> to vector<32x64xf32>
    %122 = arith.mulf %102, %121 : vector<32x64xf32>
    %123 = vector.extract_strided_slice %54 {offsets = [2, 0], sizes = [1, 64], strides = [1, 1]} : vector<3x64xf32> to vector<1x64xf32>
    %124 = arith.mulf %106, %120 : vector<1x64xf32>
    %125 = arith.subf %123, %124 : vector<1x64xf32>
    %126 = vector.broadcast %125 : vector<1x64xf32> to vector<32x64xf32>
    %127 = arith.addf %122, %126 : vector<32x64xf32>
    %cst_49 = arith.constant 0.000000e+00 : f32
    %128 = vector.broadcast %cst_49 : f32 to vector<32x64xf32>
    %129 = arith.maximumf %127, %128 : vector<32x64xf32>
    %130 = vector.extract_strided_slice %129 {offsets = [0, 0], sizes = [32, 32], strides = [1, 1]} : vector<32x64xf32> to vector<32x32xf32>
    %131 = vector.broadcast %37 : vector<32x1xf32> to vector<32x32xf32>
    %132 = arith.mulf %130, %131 : vector<32x32xf32>
    %133 = arith.truncf %132 : vector<32x32xf32> to vector<32x32xbf16>
    %134 = vector.extract_strided_slice %129 {offsets = [0, 32], sizes = [32, 32], strides = [1, 1]} : vector<32x64xf32> to vector<32x32xf32>
    %135 = vector.broadcast %44 : vector<32x1xf32> to vector<32x32xf32>
    %136 = arith.mulf %134, %135 : vector<32x32xf32>
    %137 = arith.truncf %136 : vector<32x32xf32> to vector<32x32xbf16>
    %138 = tpu.concatenate %133, %137 in 0 : vector<32x32xbf16>, vector<32x32xbf16> -> vector<64x32xbf16>
    %cst_50 = arith.constant dense<0.000000e+00> : vector<16x32xf32>
    %139 = tpu.matmul %6, %138, %cst_50 {dimension_numbers = #tpu.dot_dimension_numbers<[0], [0], [1], [1], [0, 1, 1, 1], [], []>} : vector<64x16xbf16>, vector<64x32xbf16>, vector<16x32xf32> -> vector<16x32xf32>
    %140 = arith.addf %62, %139 : vector<16x32xf32>
    %141 = arith.truncf %140 : vector<16x32xf32> to vector<16x32xbf16>
    %cst_51 = arith.constant dense<0.000000e+00> : vector<16x32xf32>
    %142 = tpu.matmul %141, %52, %cst_51 {dimension_numbers = #tpu.dot_dimension_numbers<[1], [0], [0], [1], [0, 0, 1, 1], [], []>} : vector<16x32xbf16>, vector<32x32xbf16>, vector<16x32xf32> -> vector<16x32xf32>
    %143 = vector.extract_strided_slice %55 {offsets = [0, 0], sizes = [1, 32], strides = [1, 1]} : vector<3x32xf32> to vector<1x32xf32>
    %144 = vector.broadcast %143 : vector<1x32xf32> to vector<16x32xf32>
    %145 = arith.addf %142, %144 : vector<16x32xf32>
    %cst_52 = arith.constant dense<0.000000e+00> : vector<32xf32>
    %146 = vector.multi_reduction <add>, %145, %cst_52 [0] : vector<16x32xf32> to vector<32xf32>
    %147 = vector.shape_cast %146 : vector<32xf32> to vector<1x32xf32>
    %cst_53 = arith.constant 1.600000e+01 : f32
    %148 = vector.broadcast %cst_53 : f32 to vector<1x32xf32>
    %149 = arith.divf %147, %148 : vector<1x32xf32>
    %150 = arith.mulf %145, %145 : vector<16x32xf32>
    %cst_54 = arith.constant dense<0.000000e+00> : vector<32xf32>
    %151 = vector.multi_reduction <add>, %150, %cst_54 [0] : vector<16x32xf32> to vector<32xf32>
    %152 = vector.shape_cast %151 : vector<32xf32> to vector<1x32xf32>
    %cst_55 = arith.constant 1.600000e+01 : f32
    %153 = vector.broadcast %cst_55 : f32 to vector<1x32xf32>
    %154 = arith.divf %152, %153 : vector<1x32xf32>
    %155 = arith.mulf %149, %149 : vector<1x32xf32>
    %156 = arith.subf %154, %155 : vector<1x32xf32>
    %cst_56 = arith.constant 0.000000e+00 : f32
    %157 = vector.broadcast %cst_56 : f32 to vector<1x32xf32>
    %158 = arith.maximumf %156, %157 : vector<1x32xf32>
    %159 = vector.extract_strided_slice %55 {offsets = [1, 0], sizes = [1, 32], strides = [1, 1]} : vector<3x32xf32> to vector<1x32xf32>
    %cst_57 = arith.constant 9.99999974E-6 : f32
    %160 = vector.broadcast %cst_57 : f32 to vector<1x32xf32>
    %161 = arith.addf %158, %160 : vector<1x32xf32>
    %162 = math.rsqrt %161 : vector<1x32xf32>
    %163 = arith.mulf %159, %162 : vector<1x32xf32>
    %164 = vector.broadcast %163 : vector<1x32xf32> to vector<16x32xf32>
    %165 = arith.mulf %145, %164 : vector<16x32xf32>
    %166 = vector.extract_strided_slice %55 {offsets = [2, 0], sizes = [1, 32], strides = [1, 1]} : vector<3x32xf32> to vector<1x32xf32>
    %167 = arith.mulf %149, %163 : vector<1x32xf32>
    %168 = arith.subf %166, %167 : vector<1x32xf32>
    %169 = vector.broadcast %168 : vector<1x32xf32> to vector<16x32xf32>
    %170 = arith.addf %165, %169 : vector<16x32xf32>
    %cst_58 = arith.constant 0.000000e+00 : f32
    %171 = vector.broadcast %cst_58 : f32 to vector<16x32xf32>
    %172 = arith.maximumf %170, %171 : vector<16x32xf32>
    %173 = arith.addf %62, %172 : vector<16x32xf32>
    %c1_i32 = arith.constant 1 : i32
    %174 = arith.truncf %173 : vector<16x32xf32> to vector<16x32xbf16>
    %cst_59 = arith.constant dense<0.000000e+00> : vector<64x32xf32>
    %175 = tpu.matmul %6, %174, %cst_59 {dimension_numbers = #tpu.dot_dimension_numbers<[1], [0], [0], [1], [0, 0, 1, 1], [], []>} : vector<64x16xbf16>, vector<16x32xbf16>, vector<64x32xf32> -> vector<64x32xf32>
    %176 = vector.extract_strided_slice %175 {offsets = [0, 0], sizes = [32, 32], strides = [1, 1]} : vector<64x32xf32> to vector<32x32xf32>
    %177 = vector.extract_strided_slice %175 {offsets = [32, 0], sizes = [32, 32], strides = [1, 1]} : vector<64x32xf32> to vector<32x32xf32>
    %178 = tpu.concatenate %176, %177 in 1 : vector<32x32xf32>, vector<32x32xf32> -> vector<32x64xf32>
    %179 = arith.truncf %178 : vector<32x64xf32> to vector<32x64xbf16>
    %cst_60 = arith.constant dense<0.000000e+00> : vector<32x64xf32>
    %180 = tpu.matmul %179, %46, %cst_60 {dimension_numbers = #tpu.dot_dimension_numbers<[1], [0], [0], [1], [0, 0, 1, 1], [], []>} : vector<32x64xbf16>, vector<64x64xbf16>, vector<32x64xf32> -> vector<32x64xf32>
    %181 = arith.addf %180, %61 : vector<32x64xf32>
    %cst_61 = arith.constant dense<0.000000e+00> : vector<64xf32>
    %182 = vector.multi_reduction <add>, %181, %cst_61 [0] : vector<32x64xf32> to vector<64xf32>
    %183 = vector.shape_cast %182 : vector<64xf32> to vector<1x64xf32>
    %cst_62 = arith.constant 3.200000e+01 : f32
    %184 = vector.broadcast %cst_62 : f32 to vector<1x64xf32>
    %185 = arith.divf %183, %184 : vector<1x64xf32>
    %186 = arith.mulf %181, %181 : vector<32x64xf32>
    %cst_63 = arith.constant dense<0.000000e+00> : vector<64xf32>
    %187 = vector.multi_reduction <add>, %186, %cst_63 [0] : vector<32x64xf32> to vector<64xf32>
    %188 = vector.shape_cast %187 : vector<64xf32> to vector<1x64xf32>
    %cst_64 = arith.constant 3.200000e+01 : f32
    %189 = vector.broadcast %cst_64 : f32 to vector<1x64xf32>
    %190 = arith.divf %188, %189 : vector<1x64xf32>
    %191 = arith.mulf %185, %185 : vector<1x64xf32>
    %192 = arith.subf %190, %191 : vector<1x64xf32>
    %cst_65 = arith.constant 0.000000e+00 : f32
    %193 = vector.broadcast %cst_65 : f32 to vector<1x64xf32>
    %194 = arith.maximumf %192, %193 : vector<1x64xf32>
    %195 = vector.extract_strided_slice %53 {offsets = [1, 0], sizes = [1, 64], strides = [1, 1]} : vector<3x64xf32> to vector<1x64xf32>
    %cst_66 = arith.constant 9.99999974E-6 : f32
    %196 = vector.broadcast %cst_66 : f32 to vector<1x64xf32>
    %197 = arith.addf %194, %196 : vector<1x64xf32>
    %198 = math.rsqrt %197 : vector<1x64xf32>
    %199 = arith.mulf %195, %198 : vector<1x64xf32>
    %200 = vector.broadcast %199 : vector<1x64xf32> to vector<32x64xf32>
    %201 = arith.mulf %181, %200 : vector<32x64xf32>
    %202 = vector.extract_strided_slice %53 {offsets = [2, 0], sizes = [1, 64], strides = [1, 1]} : vector<3x64xf32> to vector<1x64xf32>
    %203 = arith.mulf %185, %199 : vector<1x64xf32>
    %204 = arith.subf %202, %203 : vector<1x64xf32>
    %205 = vector.broadcast %204 : vector<1x64xf32> to vector<32x64xf32>
    %206 = arith.addf %201, %205 : vector<32x64xf32>
    %cst_67 = arith.constant 0.000000e+00 : f32
    %207 = vector.broadcast %cst_67 : f32 to vector<32x64xf32>
    %208 = arith.maximumf %206, %207 : vector<32x64xf32>
    %209 = arith.truncf %208 : vector<32x64xf32> to vector<32x64xbf16>
    %cst_68 = arith.constant dense<0.000000e+00> : vector<32x64xf32>
    %210 = tpu.matmul %209, %50, %cst_68 {dimension_numbers = #tpu.dot_dimension_numbers<[1], [0], [0], [1], [0, 0, 1, 1], [], []>} : vector<32x64xbf16>, vector<64x64xbf16>, vector<32x64xf32> -> vector<32x64xf32>
    %211 = vector.extract_strided_slice %54 {offsets = [0, 0], sizes = [1, 64], strides = [1, 1]} : vector<3x64xf32> to vector<1x64xf32>
    %212 = vector.broadcast %211 : vector<1x64xf32> to vector<32x64xf32>
    %213 = arith.addf %210, %212 : vector<32x64xf32>
    %cst_69 = arith.constant dense<0.000000e+00> : vector<64xf32>
    %214 = vector.multi_reduction <add>, %213, %cst_69 [0] : vector<32x64xf32> to vector<64xf32>
    %215 = vector.shape_cast %214 : vector<64xf32> to vector<1x64xf32>
    %cst_70 = arith.constant 3.200000e+01 : f32
    %216 = vector.broadcast %cst_70 : f32 to vector<1x64xf32>
    %217 = arith.divf %215, %216 : vector<1x64xf32>
    %218 = arith.mulf %213, %213 : vector<32x64xf32>
    %cst_71 = arith.constant dense<0.000000e+00> : vector<64xf32>
    %219 = vector.multi_reduction <add>, %218, %cst_71 [0] : vector<32x64xf32> to vector<64xf32>
    %220 = vector.shape_cast %219 : vector<64xf32> to vector<1x64xf32>
    %cst_72 = arith.constant 3.200000e+01 : f32
    %221 = vector.broadcast %cst_72 : f32 to vector<1x64xf32>
    %222 = arith.divf %220, %221 : vector<1x64xf32>
    %223 = arith.mulf %217, %217 : vector<1x64xf32>
    %224 = arith.subf %222, %223 : vector<1x64xf32>
    %cst_73 = arith.constant 0.000000e+00 : f32
    %225 = vector.broadcast %cst_73 : f32 to vector<1x64xf32>
    %226 = arith.maximumf %224, %225 : vector<1x64xf32>
    %227 = vector.extract_strided_slice %54 {offsets = [1, 0], sizes = [1, 64], strides = [1, 1]} : vector<3x64xf32> to vector<1x64xf32>
    %cst_74 = arith.constant 9.99999974E-6 : f32
    %228 = vector.broadcast %cst_74 : f32 to vector<1x64xf32>
    %229 = arith.addf %226, %228 : vector<1x64xf32>
    %230 = math.rsqrt %229 : vector<1x64xf32>
    %231 = arith.mulf %227, %230 : vector<1x64xf32>
    %232 = vector.broadcast %231 : vector<1x64xf32> to vector<32x64xf32>
    %233 = arith.mulf %213, %232 : vector<32x64xf32>
    %234 = vector.extract_strided_slice %54 {offsets = [2, 0], sizes = [1, 64], strides = [1, 1]} : vector<3x64xf32> to vector<1x64xf32>
    %235 = arith.mulf %217, %231 : vector<1x64xf32>
    %236 = arith.subf %234, %235 : vector<1x64xf32>
    %237 = vector.broadcast %236 : vector<1x64xf32> to vector<32x64xf32>
    %238 = arith.addf %233, %237 : vector<32x64xf32>
    %cst_75 = arith.constant 0.000000e+00 : f32
    %239 = vector.broadcast %cst_75 : f32 to vector<32x64xf32>
    %240 = arith.maximumf %238, %239 : vector<32x64xf32>
    %241 = vector.extract_strided_slice %240 {offsets = [0, 0], sizes = [32, 32], strides = [1, 1]} : vector<32x64xf32> to vector<32x32xf32>
    %242 = vector.broadcast %37 : vector<32x1xf32> to vector<32x32xf32>
    %243 = arith.mulf %241, %242 : vector<32x32xf32>
    %244 = arith.truncf %243 : vector<32x32xf32> to vector<32x32xbf16>
    %245 = vector.extract_strided_slice %240 {offsets = [0, 32], sizes = [32, 32], strides = [1, 1]} : vector<32x64xf32> to vector<32x32xf32>
    %246 = vector.broadcast %44 : vector<32x1xf32> to vector<32x32xf32>
    %247 = arith.mulf %245, %246 : vector<32x32xf32>
    %248 = arith.truncf %247 : vector<32x32xf32> to vector<32x32xbf16>
    %249 = tpu.concatenate %244, %248 in 0 : vector<32x32xbf16>, vector<32x32xbf16> -> vector<64x32xbf16>
    %cst_76 = arith.constant dense<0.000000e+00> : vector<16x32xf32>
    %250 = tpu.matmul %6, %249, %cst_76 {dimension_numbers = #tpu.dot_dimension_numbers<[0], [0], [1], [1], [0, 1, 1, 1], [], []>} : vector<64x16xbf16>, vector<64x32xbf16>, vector<16x32xf32> -> vector<16x32xf32>
    %251 = arith.addf %173, %250 : vector<16x32xf32>
    %252 = arith.truncf %251 : vector<16x32xf32> to vector<16x32xbf16>
    %cst_77 = arith.constant dense<0.000000e+00> : vector<16x32xf32>
    %253 = tpu.matmul %252, %52, %cst_77 {dimension_numbers = #tpu.dot_dimension_numbers<[1], [0], [0], [1], [0, 0, 1, 1], [], []>} : vector<16x32xbf16>, vector<32x32xbf16>, vector<16x32xf32> -> vector<16x32xf32>
    %254 = vector.extract_strided_slice %55 {offsets = [0, 0], sizes = [1, 32], strides = [1, 1]} : vector<3x32xf32> to vector<1x32xf32>
    %255 = vector.broadcast %254 : vector<1x32xf32> to vector<16x32xf32>
    %256 = arith.addf %253, %255 : vector<16x32xf32>
    %cst_78 = arith.constant dense<0.000000e+00> : vector<32xf32>
    %257 = vector.multi_reduction <add>, %256, %cst_78 [0] : vector<16x32xf32> to vector<32xf32>
    %258 = vector.shape_cast %257 : vector<32xf32> to vector<1x32xf32>
    %cst_79 = arith.constant 1.600000e+01 : f32
    %259 = vector.broadcast %cst_79 : f32 to vector<1x32xf32>
    %260 = arith.divf %258, %259 : vector<1x32xf32>
    %261 = arith.mulf %256, %256 : vector<16x32xf32>
    %cst_80 = arith.constant dense<0.000000e+00> : vector<32xf32>
    %262 = vector.multi_reduction <add>, %261, %cst_80 [0] : vector<16x32xf32> to vector<32xf32>
    %263 = vector.shape_cast %262 : vector<32xf32> to vector<1x32xf32>
    %cst_81 = arith.constant 1.600000e+01 : f32
    %264 = vector.broadcast %cst_81 : f32 to vector<1x32xf32>
    %265 = arith.divf %263, %264 : vector<1x32xf32>
    %266 = arith.mulf %260, %260 : vector<1x32xf32>
    %267 = arith.subf %265, %266 : vector<1x32xf32>
    %cst_82 = arith.constant 0.000000e+00 : f32
    %268 = vector.broadcast %cst_82 : f32 to vector<1x32xf32>
    %269 = arith.maximumf %267, %268 : vector<1x32xf32>
    %270 = vector.extract_strided_slice %55 {offsets = [1, 0], sizes = [1, 32], strides = [1, 1]} : vector<3x32xf32> to vector<1x32xf32>
    %cst_83 = arith.constant 9.99999974E-6 : f32
    %271 = vector.broadcast %cst_83 : f32 to vector<1x32xf32>
    %272 = arith.addf %269, %271 : vector<1x32xf32>
    %273 = math.rsqrt %272 : vector<1x32xf32>
    %274 = arith.mulf %270, %273 : vector<1x32xf32>
    %275 = vector.broadcast %274 : vector<1x32xf32> to vector<16x32xf32>
    %276 = arith.mulf %256, %275 : vector<16x32xf32>
    %277 = vector.extract_strided_slice %55 {offsets = [2, 0], sizes = [1, 32], strides = [1, 1]} : vector<3x32xf32> to vector<1x32xf32>
    %278 = arith.mulf %260, %274 : vector<1x32xf32>
    %279 = arith.subf %277, %278 : vector<1x32xf32>
    %280 = vector.broadcast %279 : vector<1x32xf32> to vector<16x32xf32>
    %281 = arith.addf %276, %280 : vector<16x32xf32>
    %cst_84 = arith.constant 0.000000e+00 : f32
    %282 = vector.broadcast %cst_84 : f32 to vector<16x32xf32>
    %283 = arith.maximumf %281, %282 : vector<16x32xf32>
    %284 = arith.addf %173, %283 : vector<16x32xf32>
    %c0_85 = arith.constant 0 : index
    %c0_86 = arith.constant 0 : index
    %285 = vector.load %arg1[%c0_85, %c0_86] : memref<16x1xi32, #tpu.memory_space<vmem>>, vector<16x1xi32>
    %c0_i32_87 = arith.constant 0 : i32
    %286 = vector.broadcast %c0_i32_87 : i32 to vector<16x1xi32>
    %287 = arith.cmpi eq, %285, %286 : vector<16x1xi32>
    %cst_88 = arith.constant -3.40282347E+38 : f32
    %288 = vector.shape_cast %287 : vector<16x1xi1> to vector<16x1xi1>
    %289 = vector.broadcast %288 : vector<16x1xi1> to vector<16x32xi1>
    %290 = vector.broadcast %cst_88 : f32 to vector<16x32xf32>
    %291 = arith.select %289, %284, %290 : vector<16x32xi1>, vector<16x32xf32>
    %cst_89 = arith.constant dense<0xFF800000> : vector<32xf32>
    %292 = vector.multi_reduction <maximumf>, %291, %cst_89 [0] : vector<16x32xf32> to vector<32xf32>
    %293 = vector.shape_cast %292 : vector<32xf32> to vector<1x32xf32>
    %c1_i32_90 = arith.constant 1 : i32
    %294 = vector.broadcast %c1_i32_90 : i32 to vector<16x1xi32>
    %295 = arith.cmpi eq, %285, %294 : vector<16x1xi32>
    %cst_91 = arith.constant -3.40282347E+38 : f32
    %296 = vector.shape_cast %295 : vector<16x1xi1> to vector<16x1xi1>
    %297 = vector.broadcast %296 : vector<16x1xi1> to vector<16x32xi1>
    %298 = vector.broadcast %cst_91 : f32 to vector<16x32xf32>
    %299 = arith.select %297, %284, %298 : vector<16x32xi1>, vector<16x32xf32>
    %cst_92 = arith.constant dense<0xFF800000> : vector<32xf32>
    %300 = vector.multi_reduction <maximumf>, %299, %cst_92 [0] : vector<16x32xf32> to vector<32xf32>
    %301 = vector.shape_cast %300 : vector<32xf32> to vector<1x32xf32>
    %302 = tpu.concatenate %293, %301 in 0 : vector<1x32xf32>, vector<1x32xf32> -> vector<2x32xf32>
    %c0_93 = arith.constant 0 : index
    %c0_94 = arith.constant 0 : index
    %303 = vector.load %arg11[%c0_93, %c0_94] : memref<2x32xf32, #tpu.memory_space<vmem>>, vector<2x32xf32>
    tpu.vector_store %arg11[%c0_93, %c0_94], %302 {strides = array<i32>} : memref<2x32xf32, #tpu.memory_space<vmem>>, vector<2x32xf32>,
    return
  }
}

</mosaic_0001>

<llo_original>
// kernel: tpu_custom_call.1
$region0: #{tpu_custom_call.1}
  #allocation0 [shape = 'u32[]', space=smem, size = 0x4, offset = 0x4, fixed_abs, tag = 'smem constant byte address 0x4 - core index']
  #allocation1 [shape = 'u32[144,128]{1,0:T(1,128)}', space=vmem, size = 0x12000, scoped, tag = 'internal scratch']
  %s0 = inlined_call_operand.vmem [shape: s32[64,1], index: 0, kind: input, shape index: {}]
  %s1 = inlined_call_operand.vmem [shape: s32[16,1], index: 1, kind: input, shape index: {}]
  %s2 = inlined_call_operand.hbm [shape: f32[16,32], index: 2, kind: input, shape index: {}]
  %s3 = inlined_call_operand.hbm [shape: f32[32,32], index: 3, kind: input, shape index: {}]
  %s4 = inlined_call_operand.vmem [shape: f32[64,64], index: 4, kind: input, shape index: {}]
  %s5 = inlined_call_operand.hbm [shape: f32[32,64], index: 5, kind: input, shape index: {}]
  %s6 = inlined_call_operand.hbm [shape: f32[3,64], index: 6, kind: input, shape index: {}]
  %s7 = inlined_call_operand.hbm [shape: f32[64,64], index: 7, kind: input, shape index: {}]
  %s8 = inlined_call_operand.hbm [shape: f32[3,64], index: 8, kind: input, shape index: {}]
  %s9 = inlined_call_operand.vmem [shape: f32[32,32], index: 9, kind: input, shape index: {}]
  %s10 = inlined_call_operand.vmem [shape: f32[3,32], index: 10, kind: input, shape index: {}]
  %s11 = inlined_call_operand.hbm [shape: f32[2,32], index: 11, kind: output, shape index: {}]
  %s12 = sld [smem:[#allocation0]]
  $region78: #{tpu_custom_call.1} parent=0
    _
  %s14 = ssub.s32 1, %s12
  %s15 = scalar_select 0, %s14, %s12
  $region1: #{tpu_custom_call.1} parent=0
    #allocation2 [shape = 'u8[8192]{0}', space=vmem, size = 0x2000, scoped, tag = 'input window, operand 2, single buffered']
    #allocation3 [shape = 's32[1]{0}', space=sflag, size = 0x4, scoped, tag = 'scoped memory for tpu_custom_call.1']
    #allocation4 [shape = 's32[1]{0}', space=sflag, size = 0x4, scoped, tag = 'scoped memory for tpu_custom_call.1']
    #allocation5 [shape = 'u8[16384]{0}', space=vmem, size = 0x4000, scoped, tag = 'input window, operand 3, single buffered']
    #allocation6 [shape = 's32[1]{0}', space=sflag, size = 0x4, scoped, tag = 'scoped memory for tpu_custom_call.1']
    #allocation7 [shape = 'u8[16384]{0}', space=vmem, size = 0x4000, scoped, tag = 'input window, operand 5, single buffered']
    #allocation8 [shape = 'u8[2048]{0}', space=vmem, size = 0x800, scoped, tag = 'input window, operand 6, single buffered']
    #allocation9 [shape = 's32[1]{0}', space=sflag, size = 0x4, scoped, tag = 'scoped memory for tpu_custom_call.1']
    #allocation10 [shape = 'u8[32768]{0}', space=vmem, size = 0x8000, scoped, tag = 'input window, operand 7, single buffered']
    #allocation11 [shape = 'u8[2048]{0}', space=vmem, size = 0x800, scoped, tag = 'input window, operand 8, single buffered']
    #allocation12 [shape = 's32[1]{0}', space=sflag, size = 0x4, scoped, tag = 'scoped memory for tpu_custom_call.1']
    #allocation13 [shape = 'u8[1024]{0}', space=vmem, size = 0x400, scoped, tag = 'output window, operand 0, single buffered']
    %16 = vsyncpa [#allocation3], 0
    %17 = vsyncpa [#allocation6], 0
    %18 = vsyncpa [#allocation9], 0
    %19 = vsyncpa [#allocation12], 0
    %20 = vsyncpa [#allocation4], 0
    // Predicated region
    $region2: #{tpu_custom_call.1} parent=1 // pred_check
      _
    $region3: #{tpu_custom_call.1} parent=1 // pred_check_branch
      %22 = sbr.rel (0) target = $region5
    $region4: #{tpu_custom_call.1} parent=1 // pred_region
      _
    $region5: #{tpu_custom_call.1} parent=1 // pred_fallthru
      _
    // Predicated region
    $region6: #{tpu_custom_call.1} parent=1 // pred_check
      _
    $region7: #{tpu_custom_call.1} parent=1 // pred_check_branch
      %24 = sbr.rel (0) target = $region9
    $region8: #{tpu_custom_call.1} parent=1 // pred_region
      _
    $region9: #{tpu_custom_call.1} parent=1 // pred_fallthru
      _
    // Predicated region
    $region10: #{tpu_custom_call.1} parent=1 // pred_check
      _
    $region11: #{tpu_custom_call.1} parent=1 // pred_check_branch
      %26 = sbr.rel (0) target = $region13
    $region12: #{tpu_custom_call.1} parent=1 // pred_region
      %s28 = ssub.s32 256, 256
      %29 = vsyncadd [#allocation3], %s28
      %s30 = sshll.u32 [#allocation2], 4
      %s31 = int_to_ptr.vmem [resolvable:$true] %s30
      %36 = dma.hbm_to_vmem [thread:$0]  %s2, 256, %s31, [#allocation3], 128, 128, 8
    $region13: #{tpu_custom_call.1} parent=1 // pred_fallthru
      _
    // Predicated region
    $region14: #{tpu_custom_call.1} parent=1 // pred_check
      _
    $region15: #{tpu_custom_call.1} parent=1 // pred_check_branch
      %38 = sbr.rel (0) target = $region17
    $region16: #{tpu_custom_call.1} parent=1 // pred_region
      %s40 = ssub.s32 512, 512
      %41 = vsyncadd [#allocation6], %s40
      %s42 = sshll.u32 [#allocation5], 4
      %s43 = int_to_ptr.vmem [resolvable:$true] %s42
      %48 = dma.hbm_to_vmem [thread:$0]  %s3, 512, %s43, [#allocation6], 128, 128, 8
    $region17: #{tpu_custom_call.1} parent=1 // pred_fallthru
      _
    // Predicated region
    $region18: #{tpu_custom_call.1} parent=1 // pred_check
      _
    $region19: #{tpu_custom_call.1} parent=1 // pred_check_branch
      %50 = sbr.rel (0) target = $region21
    $region20: #{tpu_custom_call.1} parent=1 // pred_region
      _
    $region21: #{tpu_custom_call.1} parent=1 // pred_fallthru
      _
    // Predicated region
    $region22: #{tpu_custom_call.1} parent=1 // pred_check
      _
    $region23: #{tpu_custom_call.1} parent=1 // pred_check_branch
      %52 = sbr.rel (0) target = $region25
    $region24: #{tpu_custom_call.1} parent=1 // pred_region
      %s54 = ssub.s32 512, 512
      %55 = vsyncadd [#allocation6], %s54
      %s56 = sshll.u32 [#allocation7], 4
      %s57 = int_to_ptr.vmem [resolvable:$true] %s56
      %62 = dma.hbm_to_vmem [thread:$0]  %s5, 512, %s57, [#allocation6], 128, 128, 8
    $region25: #{tpu_custom_call.1} parent=1 // pred_fallthru
      _
    // Predicated region
    $region26: #{tpu_custom_call.1} parent=1 // pred_check
      _
    $region27: #{tpu_custom_call.1} parent=1 // pred_check_branch
      %64 = sbr.rel (0) target = $region29
    $region28: #{tpu_custom_call.1} parent=1 // pred_region
      %s66 = ssub.s32 64, 64
      %67 = vsyncadd [#allocation9], %s66
      %s69 = sshll.u32 [#allocation8], 4
      %s70 = int_to_ptr.vmem [resolvable:$true] %s69
      %72 = dma.hbm_to_vmem [thread:$0]  %s6, 64, %s70, [#allocation9]
    $region29: #{tpu_custom_call.1} parent=1 // pred_fallthru
      _
    // Predicated region
    $region30: #{tpu_custom_call.1} parent=1 // pred_check
      _
    $region31: #{tpu_custom_call.1} parent=1 // pred_check_branch
      %74 = sbr.rel (0) target = $region33
    $region32: #{tpu_custom_call.1} parent=1 // pred_region
      %s76 = ssub.s32 1024, 1024
      %77 = vsyncadd [#allocation9], %s76
      %s78 = sshll.u32 [#allocation10], 4
      %s79 = int_to_ptr.vmem [resolvable:$true] %s78
      %84 = dma.hbm_to_vmem [thread:$0]  %s7, 1024, %s79, [#allocation9], 128, 128, 8
    $region33: #{tpu_custom_call.1} parent=1 // pred_fallthru
      _
    // Predicated region
    $region34: #{tpu_custom_call.1} parent=1 // pred_check
      _
    $region35: #{tpu_custom_call.1} parent=1 // pred_check_branch
      %86 = sbr.rel (0) target = $region37
    $region36: #{tpu_custom_call.1} parent=1 // pred_region
      %s88 = ssub.s32 64, 64
      %89 = vsyncadd [#allocation12], %s88
      %s91 = sshll.u32 [#allocation11], 4
      %s92 = int_to_ptr.vmem [resolvable:$true] %s91
      %94 = dma.hbm_to_vmem [thread:$0]  %s8, 64, %s92, [#allocation12]
    $region37: #{tpu_custom_call.1} parent=1 // pred_fallthru
      _
    // Predicated region
    $region38: #{tpu_custom_call.1} parent=1 // pred_check
      _
    $region39: #{tpu_custom_call.1} parent=1 // pred_check_branch
      %96 = sbr.rel (0) target = $region41
    $region40: #{tpu_custom_call.1} parent=1 // pred_region
      _
    $region41: #{tpu_custom_call.1} parent=1 // pred_fallthru
      _
    // Predicated region
    $region42: #{tpu_custom_call.1} parent=1 // pred_check
      _
    $region43: #{tpu_custom_call.1} parent=1 // pred_check_branch
      %98 = sbr.rel (0) target = $region45
    $region44: #{tpu_custom_call.1} parent=1 // pred_region
      _
    $region45: #{tpu_custom_call.1} parent=1 // pred_fallthru
      _
    // Predicated region
    $region46: #{tpu_custom_call.1} parent=1 // pred_check
      _
    $region47: #{tpu_custom_call.1} parent=1 // pred_check_branch
      %100 = sbr.rel (0) target = $region49
    $region48: #{tpu_custom_call.1} parent=1 // pred_region
      %101 = dma.done [#allocation3], 256
    $region49: #{tpu_custom_call.1} parent=1 // pred_fallthru
      _
    // Predicated region
    $region50: #{tpu_custom_call.1} parent=1 // pred_check
      _
    $region51: #{tpu_custom_call.1} parent=1 // pred_check_branch
      %103 = sbr.rel (0) target = $region53
    $region52: #{tpu_custom_call.1} parent=1 // pred_region
      %104 = dma.done [#allocation6], 512
    $region53: #{tpu_custom_call.1} parent=1 // pred_fallthru
      _
    // Predicated region
    $region54: #{tpu_custom_call.1} parent=1 // pred_check
      _
    $region55: #{tpu_custom_call.1} parent=1 // pred_check_branch
      %106 = sbr.rel (0) target = $region57
    $region56: #{tpu_custom_call.1} parent=1 // pred_region
      %107 = dma.done [#allocation6], 512
    $region57: #{tpu_custom_call.1} parent=1 // pred_fallthru
      _
    // Predicated region
    $region58: #{tpu_custom_call.1} parent=1 // pred_check
      _
    $region59: #{tpu_custom_call.1} parent=1 // pred_check_branch
      %109 = sbr.rel (0) target = $region61
    $region60: #{tpu_custom_call.1} parent=1 // pred_region
      %110 = dma.done [#allocation9], 64
    $region61: #{tpu_custom_call.1} parent=1 // pred_fallthru
      _
    // Predicated region
    $region62: #{tpu_custom_call.1} parent=1 // pred_check
      _
    $region63: #{tpu_custom_call.1} parent=1 // pred_check_branch
      %112 = sbr.rel (0) target = $region65
    $region64: #{tpu_custom_call.1} parent=1 // pred_region
      %113 = dma.done [#allocation9], 1024
    $region65: #{tpu_custom_call.1} parent=1 // pred_fallthru
      _
    // Predicated region
    $region66: #{tpu_custom_call.1} parent=1 // pred_check
      _
    $region67: #{tpu_custom_call.1} parent=1 // pred_check_branch
      %115 = sbr.rel (0) target = $region69
    $region68: #{tpu_custom_call.1} parent=1 // pred_region
      %116 = dma.done [#allocation12], 64
    $region69: #{tpu_custom_call.1} parent=1 // pred_fallthru
      _
    %v118 = vlaneseq
    %v119 = vand.u32 %v118, 127
    %v120 = vld [vmem:[%s0] sm:$0xff]
    %v121 = vld [vmem:[%s0 + $0x8] sm:$0xff]
    %v122 = vld [vmem:[%s0 + $0x10] sm:$0xff]
    %v123 = vld [vmem:[%s0 + $0x18] sm:$0xff]
    %v124 = vld [vmem:[%s0 + $0x20] sm:$0xff]
    %v125 = vld [vmem:[%s0 + $0x28] sm:$0xff]
    %v126 = vld [vmem:[%s0 + $0x30] sm:$0xff]
    %v127 = vld [vmem:[%s0 + $0x38] sm:$0xff]
    %128 = vset.pattern.permute.xlu0 0
    %129 = vperm.xlu0 %128, %v120
    %v130 = vpop.permute.xlu0 %129
    %131 = vset.pattern.permute.xlu0 0
    %132 = vperm.xlu0 %131, %v121
    %v133 = vpop.permute.xlu0 %132
    %134 = vset.pattern.permute.xlu0 0
    %135 = vperm.xlu0 %134, %v122
    %v136 = vpop.permute.xlu0 %135
    %137 = vset.pattern.permute.xlu0 0
    %138 = vperm.xlu0 %137, %v123
    %v139 = vpop.permute.xlu0 %138
    %140 = vset.pattern.permute.xlu0 0
    %141 = vperm.xlu0 %140, %v124
    %v142 = vpop.permute.xlu0 %141
    %143 = vset.pattern.permute.xlu0 0
    %144 = vperm.xlu0 %143, %v125
    %v145 = vpop.permute.xlu0 %144
    %146 = vset.pattern.permute.xlu0 0
    %147 = vperm.xlu0 %146, %v126
    %v148 = vpop.permute.xlu0 %147
    %149 = vset.pattern.permute.xlu0 0
    %150 = vperm.xlu0 %149, %v127
    %v151 = vpop.permute.xlu0 %150
    %vm152 = vcmp.eq.s32.totalorder %v130, %v119
    %vm153 = vcmp.eq.s32.totalorder %v133, %v119
    %vm154 = vcmp.eq.s32.totalorder %v136, %v119
    %vm155 = vcmp.eq.s32.totalorder %v139, %v119
    %vm156 = vcmp.eq.s32.totalorder %v142, %v119
    %vm157 = vcmp.eq.s32.totalorder %v145, %v119
    %vm158 = vcmp.eq.s32.totalorder %v148, %v119
    %vm159 = vcmp.eq.s32.totalorder %v151, %v119
    %v160 = vsel %vm152, 1, 0
    %v161 = vsel %vm153, 1, 0
    %v162 = vsel %vm154, 1, 0
    %v163 = vsel %vm155, 1, 0
    %v164 = vsel %vm156, 1, 0
    %v165 = vsel %vm157, 1, 0
    %v166 = vsel %vm158, 1, 0
    %v167 = vsel %vm159, 1, 0
    %v168 = vcvt.s32.f32 %v160
    %v169 = vcvt.s32.f32 %v161
    %v170 = vcvt.s32.f32 %v162
    %v171 = vcvt.s32.f32 %v163
    %v172 = vcvt.s32.f32 %v164
    %v173 = vcvt.s32.f32 %v165
    %v174 = vcvt.s32.f32 %v166
    %v175 = vcvt.s32.f32 %v167
    %v176 = vpack.c.bf16 %v169, %v168
    %v177 = vpack.c.bf16 %v171, %v170
    %v178 = vpack.c.bf16 %v173, %v172
    %v179 = vpack.c.bf16 %v175, %v174
    %v180 = vunpack.c.l.bf16 %v176
    %v181 = vunpack.c.h.bf16 %v176
    %v182 = vunpack.c.l.bf16 %v177
    %v183 = vunpack.c.h.bf16 %v177
    %vm184 = vcmask 130048
    %v185 = vsel %vm184, %v180, 0.0
    %v186 = vsel %vm184, %v181, 0.0
    %v187 = vadd.f32 %v185, %v186
    %v188 = vsel %vm184, %v182, 0.0
    %v189 = vadd.f32 %v187, %v188
    %v190 = vsel %vm184, %v183, 0.0
    %v191 = vadd.f32 %v189, %v190
    %v192 = vrot.slane %v191, 4
    %v193 = vadd.f32 %v191, %v192
    %v194 = vrot.slane %v193, 2
    %v195 = vadd.f32 %v193, %v194
    %v196 = vrot.slane %v195, 1
    %v197 = vadd.f32 %v195, %v196
    %v198 = vunpack.c.l.bf16 %v178
    %v199 = vunpack.c.h.bf16 %v178
    %v200 = vunpack.c.l.bf16 %v179
    %v201 = vunpack.c.h.bf16 %v179
    %v202 = vsel %vm184, %v198, 0.0
    %v203 = vsel %vm184, %v199, 0.0
    %v204 = vadd.f32 %v202, %v203
    %v205 = vsel %vm184, %v200, 0.0
    %v206 = vadd.f32 %v204, %v205
    %v207 = vsel %vm184, %v201, 0.0
    %v208 = vadd.f32 %v206, %v207
    %v209 = vrot.slane %v208, 4
    %v210 = vadd.f32 %v208, %v209
    %v211 = vrot.slane %v210, 2
    %v212 = vadd.f32 %v210, %v211
    %v213 = vrot.slane %v212, 1
    %v214 = vadd.f32 %v212, %v213
    %vm215 = vcmp.gt.f32.partialorder %v197, 0.0
    %v216 = vmax.f32 %v197, 1.0
    %v217 = vrcp.pop %v216
    %v218 = vmul.f32 1.0, %v217
    %v219 = vsel %vm215, %v218, 0.0
    %vm220 = vcmp.gt.f32.partialorder %v214, 0.0
    %v221 = vmax.f32 %v214, 1.0
    %v222 = vrcp.pop %v221
    %v223 = vmul.f32 1.0, %v222
    %v224 = vsel %vm220, %v223, 0.0
    %v225 = vsel %vm152, %v219, 0.0
    %v226 = vsel %vm153, %v219, 0.0
    %v227 = vsel %vm154, %v219, 0.0
    %v228 = vsel %vm155, %v219, 0.0
    %v229 = vsel %vm184, %v225, 0.0
    %230 = vadd.xlane.f32.xlu0 %v229
    %v231 = vpop.xlane.xlu0 %230
    %v232 = vsel %vm184, %v226, 0.0
    %233 = vadd.xlane.f32.xlu0 %v232
    %v234 = vpop.xlane.xlu0 %233
    %v235 = vsel %vm184, %v227, 0.0
    %236 = vadd.xlane.f32.xlu0 %v235
    %v237 = vpop.xlane.xlu0 %236
    %v238 = vsel %vm184, %v228, 0.0
    %239 = vadd.xlane.f32.xlu0 %v238
    %v240 = vpop.xlane.xlu0 %239
    %v241 = vsel %vm156, %v224, 0.0
    %v242 = vsel %vm157, %v224, 0.0
    %v243 = vsel %vm158, %v224, 0.0
    %v244 = vsel %vm159, %v224, 0.0
    %v245 = vsel %vm184, %v241, 0.0
    %246 = vadd.xlane.f32.xlu0 %v245
    %v247 = vpop.xlane.xlu0 %246
    %v248 = vsel %vm184, %v242, 0.0
    %249 = vadd.xlane.f32.xlu0 %v248
    %v250 = vpop.xlane.xlu0 %249
    %v251 = vsel %vm184, %v243, 0.0
    %252 = vadd.xlane.f32.xlu0 %v251
    %v253 = vpop.xlane.xlu0 %252
    %v254 = vsel %vm184, %v244, 0.0
    %255 = vadd.xlane.f32.xlu0 %v254
    %v256 = vpop.xlane.xlu0 %255
    %v257 = vld [vmem:[%s4] sm:$0xff]
    %v258 = vld [vmem:[%s4 + $0x8] sm:$0xff]
    %v259 = vld [vmem:[%s4 + $0x10] sm:$0xff]
    %v260 = vld [vmem:[%s4 + $0x18] sm:$0xff]
    %v261 = vld [vmem:[%s4 + $0x20] sm:$0xff]
    %v262 = vld [vmem:[%s4 + $0x28] sm:$0xff]
    %v263 = vld [vmem:[%s4 + $0x30] sm:$0xff]
    %v264 = vld [vmem:[%s4 + $0x38] sm:$0xff]
    %v265 = vpack.c.bf16 %v258, %v257
    %v266 = vpack.c.bf16 %v260, %v259
    %v267 = vpack.c.bf16 %v262, %v261
    %v268 = vpack.c.bf16 %v264, %v263
    %v269 = vld [vmem:[#allocation7] sm:$0xff]
    %v270 = vld [vmem:[#allocation7 + $0x8] sm:$0xff]
    %v271 = vld [vmem:[#allocation7 + $0x10] sm:$0xff]
    %v272 = vld [vmem:[#allocation7 + $0x18] sm:$0xff]
    %v273 = vpack.c.bf16 %v270, %v269
    %v274 = vpack.c.bf16 %v272, %v271
    %v275 = vld [vmem:[#allocation10] sm:$0xff]
    %v276 = vld [vmem:[#allocation10 + $0x8] sm:$0xff]
    %v277 = vld [vmem:[#allocation10 + $0x10] sm:$0xff]
    %v278 = vld [vmem:[#allocation10 + $0x18] sm:$0xff]
    %v279 = vld [vmem:[#allocation10 + $0x20] sm:$0xff]
    %v280 = vld [vmem:[#allocation10 + $0x28] sm:$0xff]
    %v281 = vld [vmem:[#allocation10 + $0x30] sm:$0xff]
    %v282 = vld [vmem:[#allocation10 + $0x38] sm:$0xff]
    %v283 = vpack.c.bf16 %v276, %v275
    %v284 = vpack.c.bf16 %v278, %v277
    %v285 = vpack.c.bf16 %v280, %v279
    %v286 = vpack.c.bf16 %v282, %v281
    %v287 = vld [vmem:[%s9] sm:$0xff]
    %v288 = vld [vmem:[%s9 + $0x8] sm:$0xff]
    %v289 = vld [vmem:[%s9 + $0x10] sm:$0xff]
    %v290 = vld [vmem:[%s9 + $0x18] sm:$0xff]
    %v291 = vpack.c.bf16 %v288, %v287
    %v292 = vpack.c.bf16 %v290, %v289
    %v293 = vld [vmem:[#allocation8] sm:$0x7]
    %v294 = vld [vmem:[#allocation11] sm:$0x7]
    %v295 = vld [vmem:[%s10] sm:$0x7]
    %v296 = vld [vmem:[#allocation5] sm:$0xff]
    %v297 = vld [vmem:[#allocation5 + $0x8] sm:$0xff]
    %v298 = vld [vmem:[#allocation5 + $0x10] sm:$0xff]
    %v299 = vld [vmem:[#allocation5 + $0x18] sm:$0xff]
    %v300 = vpack.c.bf16 %v297, %v296
    %v301 = vpack.c.bf16 %v299, %v298
    %v302 = vlaneseq
    %v303 = vshrl.u32 %v302, 7
    %v304 = vsub.s32 0, %v303
    %v305 = vrot.slane %v293, %v304
    %vm306 = vcmask 261120
    %v308 = vsel %vm306, %v300, 0
    %v311 = vsel %vm306, %v301, 0
    %313 = vmatprep.subr.bf16.mxu0 0
    %314 = vmatpush1.bf16.msra.mxu0 0
    %315 = vmatprep.subr.bf16.mxu0 0
    %316 = vmatpush1.bf16.msra.mxu0 0
    %317 = vmatprep.subr.bf16.mxu0 0
    %318 = vmatpush1.bf16.msra.mxu0 0
    %319 = vmatprep.subr.bf16.mxu0 0
    %320 = vmatpush1.bf16.msra.mxu0 0
    %321 = vmatprep.subr.bf16.mxu0 0
    %322 = vmatpush1.bf16.msra.mxu0 0
    %323 = vmatprep.subr.bf16.mxu0 0
    %324 = vmatpush1.bf16.msra.mxu0 0
    %325 = vmatprep.subr.bf16.mxu0 0
    %326 = vmatpush1.bf16.msra.mxu0 %v274
    %327 = vmatprep.subr.bf16.mxu0 0
    %328 = vmatpush1.bf16.msra.mxu0 %v273
    %329 = vmatprep.subr.bf16.mxu0 0
    %330 = vmatpush2.bf16.msra.mxu0 0
    %331 = vmatprep.subr.bf16.mxu0 0
    %332 = vmatpush2.bf16.msra.mxu0 0
    %333 = vmatprep.subr.bf16.mxu0 0
    %334 = vmatpush2.bf16.msra.mxu0 0
    %335 = vmatprep.subr.bf16.mxu0 0
    %336 = vmatpush2.bf16.msra.mxu0 0
    %337 = vmatprep.subr.bf16.mxu0 0
    %338 = vmatpush2.bf16.msra.mxu0 0
    %339 = vmatprep.subr.bf16.mxu0 0
    %340 = vmatpush2.bf16.msra.mxu0 0
    %341 = vmatprep.subr.bf16.mxu0 0
    %342 = vmatpush2.bf16.msra.mxu0 0
    %343 = vmatprep.subr.bf16.mxu0 0
    %344 = vmatpush2.bf16.msra.mxu0 0
    %345 = vmatprep.mubr.bf16.mxu0 0
    %346 = vmatmul.mubr.bf16.gmra.mxu0 %v308
    %v347 = vpop.f32.mrf.mxu0
    %v348 = vadd.f32 %v305, %v347
    %v349 = vpop.f32.mrf.mxu0
    %v350 = vpop.f32.mrf.mxu0
    %v351 = vadd.f32 %v305, %v350
    %v352 = vpop.f32.mrf.mxu0
    %353 = vmatprep.mubr.bf16.mxu0 0
    %354 = vmatmul.mubr.bf16.gmra.mxu0 %v311
    %v355 = vpop.f32.mrf.mxu0
    %v356 = vadd.f32 %v305, %v355
    %v357 = vpop.f32.mrf.mxu0
    %v358 = vpop.f32.mrf.mxu0
    %v359 = vadd.f32 %v305, %v358
    %v360 = vpop.f32.mrf.mxu0
    %361 = vdwg.mxu0
    %v362 = vld [vmem:[#allocation2] sm:$0xff]
    %v363 = vld [vmem:[#allocation2 + $0x8] sm:$0xff]
    %v364 = vpack.c.bf16 %v363, %v362
    %v366 = vsel %vm184, %v176, 0
    %v369 = vsel %vm184, %v177, 0
    %v372 = vsel %vm184, %v178, 0
    %v375 = vsel %vm184, %v179, 0
    %377 = vmatprep.subr.bf16.mxu0 0
    %378 = vmatpush1.bf16.msra.mxu0 0
    %379 = vmatprep.subr.bf16.mxu0 0
    %380 = vmatpush1.bf16.msra.mxu0 0
    %381 = vmatprep.subr.bf16.mxu0 0
    %382 = vmatpush1.bf16.msra.mxu0 0
    %383 = vmatprep.subr.bf16.mxu0 0
    %384 = vmatpush1.bf16.msra.mxu0 0
    %385 = vmatprep.subr.bf16.mxu0 0
    %386 = vmatpush1.bf16.msra.mxu0 0
    %387 = vmatprep.subr.bf16.mxu0 0
    %388 = vmatpush1.bf16.msra.mxu0 0
    %389 = vmatprep.subr.bf16.mxu0 0
    %390 = vmatpush1.bf16.msra.mxu0 0
    %391 = vmatprep.subr.bf16.mxu0 0
    %392 = vmatpush1.bf16.msra.mxu0 %v364
    %393 = vmatprep.subr.bf16.mxu0 0
    %394 = vmatpush2.bf16.msra.mxu0 0
    %395 = vmatprep.subr.bf16.mxu0 0
    %396 = vmatpush2.bf16.msra.mxu0 0
    %397 = vmatprep.subr.bf16.mxu0 0
    %398 = vmatpush2.bf16.msra.mxu0 0
    %399 = vmatprep.subr.bf16.mxu0 0
    %400 = vmatpush2.bf16.msra.mxu0 0
    %401 = vmatprep.subr.bf16.mxu0 0
    %402 = vmatpush2.bf16.msra.mxu0 0
    %403 = vmatprep.subr.bf16.mxu0 0
    %404 = vmatpush2.bf16.msra.mxu0 0
    %405 = vmatprep.subr.bf16.mxu0 0
    %406 = vmatpush2.bf16.msra.mxu0 0
    %407 = vmatprep.subr.bf16.mxu0 0
    %408 = vmatpush2.bf16.msra.mxu0 0
    %409 = vmatprep.mubr.bf16.mxu0 0
    %410 = vmatmul.mubr.bf16.gmra.mxu0 %v366
    %v411 = vpop.f32.mrf.mxu0
    %v412 = vadd.f32 0.0, %v411
    %v413 = vpop.f32.mrf.mxu0
    %v414 = vpop.f32.mrf.mxu0
    %v415 = vadd.f32 0.0, %v414
    %v416 = vpop.f32.mrf.mxu0
    %417 = vmatprep.mubr.bf16.mxu0 0
    %418 = vmatmul.mubr.bf16.gmra.mxu0 %v369
    %v419 = vpop.f32.mrf.mxu0
    %v420 = vadd.f32 0.0, %v419
    %v421 = vpop.f32.mrf.mxu0
    %v422 = vpop.f32.mrf.mxu0
    %v423 = vadd.f32 0.0, %v422
    %v424 = vpop.f32.mrf.mxu0
    %425 = vmatprep.mubr.bf16.mxu0 0
    %426 = vmatmul.mubr.bf16.gmra.mxu0 %v372
    %v427 = vpop.f32.mrf.mxu0
    %v428 = vadd.f32 0.0, %v427
    %v429 = vpop.f32.mrf.mxu0
    %v430 = vpop.f32.mrf.mxu0
    %v431 = vadd.f32 0.0, %v430
    %v432 = vpop.f32.mrf.mxu0
    %433 = vmatprep.mubr.bf16.mxu0 0
    %434 = vmatmul.mubr.bf16.gmra.mxu0 %v375
    %v435 = vpop.f32.mrf.mxu0
    %v436 = vadd.f32 0.0, %v435
    %v437 = vpop.f32.mrf.mxu0
    %v438 = vpop.f32.mrf.mxu0
    %v439 = vadd.f32 0.0, %v438
    %v440 = vpop.f32.mrf.mxu0
    %441 = vdwg.mxu0
    %446 = vrot.lane.b32.xlu0 %v428, 32
    %v447 = vpop.permute.xlu0 %446
    %448 = vrot.lane.b32.xlu0 %v431, 32
    %v449 = vpop.permute.xlu0 %448
    %450 = vrot.lane.b32.xlu0 %v436, 32
    %v451 = vpop.permute.xlu0 %450
    %452 = vrot.lane.b32.xlu0 %v439, 32
    %v453 = vpop.permute.xlu0 %452
    %v458 = vsel %vm306, %v412, %v447
    %v459 = vsel %vm306, %v415, %v449
    %v460 = vsel %vm306, %v420, %v451
    %v461 = vsel %vm306, %v423, %v453
    %v462 = vpack.c.bf16 %v459, %v458
    %v463 = vpack.c.bf16 %v461, %v460
    %vm464 = vcmask 523264
    %v466 = vsel %vm464, %v462, 0
    %v469 = vsel %vm464, %v463, 0
    %471 = vmatprep.subr.bf16.mxu0 0
    %472 = vmatpush1.bf16.msra.mxu0 0
    %473 = vmatprep.subr.bf16.mxu0 0
    %474 = vmatpush1.bf16.msra.mxu0 0
    %475 = vmatprep.subr.bf16.mxu0 0
    %476 = vmatpush1.bf16.msra.mxu0 0
    %477 = vmatprep.subr.bf16.mxu0 0
    %478 = vmatpush1.bf16.msra.mxu0 0
    %479 = vmatprep.subr.bf16.mxu0 0
    %480 = vmatpush1.bf16.msra.mxu0 %v268
    %481 = vmatprep.subr.bf16.mxu0 0
    %482 = vmatpush1.bf16.msra.mxu0 %v267
    %483 = vmatprep.subr.bf16.mxu0 0
    %484 = vmatpush1.bf16.msra.mxu0 %v266
    %485 = vmatprep.subr.bf16.mxu0 0
    %486 = vmatpush1.bf16.msra.mxu0 %v265
    %487 = vmatprep.subr.bf16.mxu0 0
    %488 = vmatpush2.bf16.msra.mxu0 0
    %489 = vmatprep.subr.bf16.mxu0 0
    %490 = vmatpush2.bf16.msra.mxu0 0
    %491 = vmatprep.subr.bf16.mxu0 0
    %492 = vmatpush2.bf16.msra.mxu0 0
    %493 = vmatprep.subr.bf16.mxu0 0
    %494 = vmatpush2.bf16.msra.mxu0 0
    %495 = vmatprep.subr.bf16.mxu0 0
    %496 = vmatpush2.bf16.msra.mxu0 0
    %497 = vmatprep.subr.bf16.mxu0 0
    %498 = vmatpush2.bf16.msra.mxu0 0
    %499 = vmatprep.subr.bf16.mxu0 0
    %500 = vmatpush2.bf16.msra.mxu0 0
    %501 = vmatprep.subr.bf16.mxu0 0
    %502 = vmatpush2.bf16.msra.mxu0 0
    %503 = vmatprep.mubr.bf16.mxu0 0
    %504 = vmatmul.mubr.bf16.gmra.mxu0 %v466
    %v505 = vpop.f32.mrf.mxu0
    %v506 = vadd.f32 %v348, %v505
    %v507 = vpop.f32.mrf.mxu0
    %v508 = vpop.f32.mrf.mxu0
    %v509 = vadd.f32 %v351, %v508
    %v510 = vpop.f32.mrf.mxu0
    %511 = vmatprep.mubr.bf16.mxu0 0
    %512 = vmatmul.mubr.bf16.gmra.mxu0 %v469
    %v513 = vpop.f32.mrf.mxu0
    %v514 = vadd.f32 %v356, %v513
    %v515 = vpop.f32.mrf.mxu0
    %v516 = vpop.f32.mrf.mxu0
    %v517 = vadd.f32 %v359, %v516
    %v518 = vpop.f32.mrf.mxu0
    %519 = vdwg.mxu0
    %v520 = vsel %vm464, %v506, 0.0
    %v521 = vsel %vm464, %v509, 0.0
    %v522 = vadd.f32 %v520, %v521
    %v523 = vsel %vm464, %v514, 0.0
    %v524 = vadd.f32 %v522, %v523
    %v525 = vsel %vm464, %v517, 0.0
    %v526 = vadd.f32 %v524, %v525
    %v527 = vrot.slane %v526, 4
    %v528 = vadd.f32 %v526, %v527
    %v529 = vrot.slane %v528, 2
    %v530 = vadd.f32 %v528, %v529
    %v531 = vrot.slane %v530, 1
    %v532 = vadd.f32 %v530, %v531
    %v533 = vrcp.pop 32.0
    %v534 = vmul.f32 %v532, %v533
    %v535 = vmul.f32 %v506, %v506
    %v536 = vmul.f32 %v509, %v509
    %v537 = vmul.f32 %v514, %v514
    %v538 = vmul.f32 %v517, %v517
    %v539 = vsel %vm464, %v535, 0.0
    %v540 = vsel %vm464, %v536, 0.0
    %v541 = vadd.f32 %v539, %v540
    %v542 = vsel %vm464, %v537, 0.0
    %v543 = vadd.f32 %v541, %v542
    %v544 = vsel %vm464, %v538, 0.0
    %v545 = vadd.f32 %v543, %v544
    %v546 = vrot.slane %v545, 4
    %v547 = vadd.f32 %v545, %v546
    %v548 = vrot.slane %v547, 2
    %v549 = vadd.f32 %v547, %v548
    %v550 = vrot.slane %v549, 1
    %v551 = vadd.f32 %v549, %v550
    %v552 = vmul.f32 %v551, %v533
    %v553 = vmul.f32 %v534, %v534
    %v554 = vsub.f32 %v552, %v553
    %v555 = vmax.f32 %v554, 0.0
    %v556 = vadd.f32 %v555, 1e-05
    %v557 = vrsqrt.pop %v556
    %v558 = vmul.f32 %v293, %v557
    %v559 = vlaneseq
    %v560 = vshrl.u32 %v559, 7
    %v561 = vsub.s32 1, %v560
    %v562 = vrot.slane %v558, %v561
    %v563 = vmul.f32 %v506, %v562
    %v564 = vmul.f32 %v509, %v562
    %v565 = vmul.f32 %v514, %v562
    %v566 = vmul.f32 %v517, %v562
    %v567 = vmul.f32 %v534, %v558
    %v569 = vrot.slane %v567, 7
    %v571 = vsub.f32 %v293, %v569
    %v572 = vlaneseq
    %v573 = vshrl.u32 %v572, 7
    %v574 = vsub.s32 2, %v573
    %v575 = vrot.slane %v571, %v574
    %v576 = vadd.f32 %v563, %v575
    %v577 = vadd.f32 %v564, %v575
    %v578 = vadd.f32 %v565, %v575
    %v579 = vadd.f32 %v566, %v575
    %v580 = vmax.f32 %v576, 0.0
    %v581 = vmax.f32 %v577, 0.0
    %v582 = vmax.f32 %v578, 0.0
    %v583 = vmax.f32 %v579, 0.0
    %v584 = vpack.c.bf16 %v581, %v580
    %v585 = vpack.c.bf16 %v583, %v582
    %v586 = vlaneseq
    %v587 = vshrl.u32 %v586, 7
    %v588 = vsub.s32 0, %v587
    %v589 = vrot.slane %v294, %v588
    %v591 = vsel %vm464, %v584, 0
    %v594 = vsel %vm464, %v585, 0
    %596 = vmatprep.subr.bf16.mxu0 0
    %597 = vmatpush1.bf16.msra.mxu0 0
    %598 = vmatprep.subr.bf16.mxu0 0
    %599 = vmatpush1.bf16.msra.mxu0 0
    %600 = vmatprep.subr.bf16.mxu0 0
    %601 = vmatpush1.bf16.msra.mxu0 0
    %602 = vmatprep.subr.bf16.mxu0 0
    %603 = vmatpush1.bf16.msra.mxu0 0
    %604 = vmatprep.subr.bf16.mxu0 0
    %605 = vmatpush1.bf16.msra.mxu0 %v286
    %606 = vmatprep.subr.bf16.mxu0 0
    %607 = vmatpush1.bf16.msra.mxu0 %v285
    %608 = vmatprep.subr.bf16.mxu0 0
    %609 = vmatpush1.bf16.msra.mxu0 %v284
    %610 = vmatprep.subr.bf16.mxu0 0
    %611 = vmatpush1.bf16.msra.mxu0 %v283
    %612 = vmatprep.subr.bf16.mxu0 0
    %613 = vmatpush2.bf16.msra.mxu0 0
    %614 = vmatprep.subr.bf16.mxu0 0
    %615 = vmatpush2.bf16.msra.mxu0 0
    %616 = vmatprep.subr.bf16.mxu0 0
    %617 = vmatpush2.bf16.msra.mxu0 0
    %618 = vmatprep.subr.bf16.mxu0 0
    %619 = vmatpush2.bf16.msra.mxu0 0
    %620 = vmatprep.subr.bf16.mxu0 0
    %621 = vmatpush2.bf16.msra.mxu0 0
    %622 = vmatprep.subr.bf16.mxu0 0
    %623 = vmatpush2.bf16.msra.mxu0 0
    %624 = vmatprep.subr.bf16.mxu0 0
    %625 = vmatpush2.bf16.msra.mxu0 0
    %626 = vmatprep.subr.bf16.mxu0 0
    %627 = vmatpush2.bf16.msra.mxu0 0
    %628 = vmatprep.mubr.bf16.mxu0 0
    %629 = vmatmul.mubr.bf16.gmra.mxu0 %v591
    %v630 = vpop.f32.mrf.mxu0
    %v631 = vadd.f32 %v589, %v630
    %v632 = vpop.f32.mrf.mxu0
    %v633 = vpop.f32.mrf.mxu0
    %v634 = vadd.f32 %v589, %v633
    %v635 = vpop.f32.mrf.mxu0
    %636 = vmatprep.mubr.bf16.mxu0 0
    %637 = vmatmul.mubr.bf16.gmra.mxu0 %v594
    %v638 = vpop.f32.mrf.mxu0
    %v639 = vadd.f32 %v589, %v638
    %v640 = vpop.f32.mrf.mxu0
    %v641 = vpop.f32.mrf.mxu0
    %v642 = vadd.f32 %v589, %v641
    %v643 = vpop.f32.mrf.mxu0
    %644 = vdwg.mxu0
    %v645 = vsel %vm464, %v631, 0.0
    %v646 = vsel %vm464, %v634, 0.0
    %v647 = vadd.f32 %v645, %v646
    %v648 = vsel %vm464, %v639, 0.0
    %v649 = vadd.f32 %v647, %v648
    %v650 = vsel %vm464, %v642, 0.0
    %v651 = vadd.f32 %v649, %v650
    %v652 = vrot.slane %v651, 4
    %v653 = vadd.f32 %v651, %v652
    %v654 = vrot.slane %v653, 2
    %v655 = vadd.f32 %v653, %v654
    %v656 = vrot.slane %v655, 1
    %v657 = vadd.f32 %v655, %v656
    %v658 = vmul.f32 %v657, %v533
    %v659 = vmul.f32 %v631, %v631
    %v660 = vmul.f32 %v634, %v634
    %v661 = vmul.f32 %v639, %v639
    %v662 = vmul.f32 %v642, %v642
    %v663 = vsel %vm464, %v659, 0.0
    %v664 = vsel %vm464, %v660, 0.0
    %v665 = vadd.f32 %v663, %v664
    %v666 = vsel %vm464, %v661, 0.0
    %v667 = vadd.f32 %v665, %v666
    %v668 = vsel %vm464, %v662, 0.0
    %v669 = vadd.f32 %v667, %v668
    %v670 = vrot.slane %v669, 4
    %v671 = vadd.f32 %v669, %v670
    %v672 = vrot.slane %v671, 2
    %v673 = vadd.f32 %v671, %v672
    %v674 = vrot.slane %v673, 1
    %v675 = vadd.f32 %v673, %v674
    %v676 = vmul.f32 %v675, %v533
    %v677 = vmul.f32 %v658, %v658
    %v678 = vsub.f32 %v676, %v677
    %v679 = vmax.f32 %v678, 0.0
    %v680 = vadd.f32 %v679, 1e-05
    %v681 = vrsqrt.pop %v680
    %v682 = vmul.f32 %v294, %v681
    %v683 = vlaneseq
    %v684 = vshrl.u32 %v683, 7
    %v685 = vsub.s32 1, %v684
    %v686 = vrot.slane %v682, %v685
    %v687 = vmul.f32 %v631, %v686
    %v688 = vmul.f32 %v634, %v686
    %v689 = vmul.f32 %v639, %v686
    %v690 = vmul.f32 %v642, %v686
    %v691 = vmul.f32 %v658, %v682
    %v693 = vrot.slane %v691, 7
    %v695 = vsub.f32 %v294, %v693
    %v696 = vlaneseq
    %v697 = vshrl.u32 %v696, 7
    %v698 = vsub.s32 2, %v697
    %v699 = vrot.slane %v695, %v698
    %v700 = vadd.f32 %v687, %v699
    %v701 = vadd.f32 %v688, %v699
    %v702 = vadd.f32 %v689, %v699
    %v703 = vadd.f32 %v690, %v699
    %v704 = vmax.f32 %v700, 0.0
    %v705 = vmax.f32 %v701, 0.0
    %v706 = vmax.f32 %v702, 0.0
    %v707 = vmax.f32 %v703, 0.0
    %v708 = vmul.f32 %v704, %v231
    %v709 = vmul.f32 %v705, %v234
    %v710 = vmul.f32 %v706, %v237
    %v711 = vmul.f32 %v707, %v240
    %v712 = vpack.c.bf16 %v709, %v708
    %v713 = vpack.c.bf16 %v711, %v710
    %v714 = vmul.f32 %v704, %v247
    %v715 = vmul.f32 %v705, %v250
    %v716 = vmul.f32 %v706, %v253
    %v717 = vmul.f32 %v707, %v256
    %v718 = vpack.c.bf16 %v715, %v714
    %v719 = vpack.c.bf16 %v717, %v716
    %722 = vrot.lane.b32.xlu0 %v718, 96
    %v723 = vpop.permute.xlu0 %722
    %724 = vrot.lane.b32.xlu0 %v719, 96
    %v725 = vpop.permute.xlu0 %724
    %728 = vxpose.xlu0.c.b16.start [1/8] %v176, 128
    %729 = vxpose.xlu0.c.b16.cont [2/8] %v177, 128
    %730 = vxpose.xlu0.c.b16.cont [3/8] %v178, 128
    %731 = vxpose.xlu0.c.b16.cont [4/8] %v179, 128
    %732 = vxpose.xlu0.c.b16.cont [5/8] 0, 128
    %733 = vxpose.xlu0.c.b16.cont [6/8] 0, 128
    %734 = vxpose.xlu0.c.b16.cont [7/8] 0, 128
    %735 = vxpose.xlu0.c.b16.end [8/8] 0, 128
    %v736 = vpop.trf.xlu0
    %v737 = vpop.trf.xlu0
    %v738 = vpop.trf.xlu0
    %v739 = vpop.trf.xlu0
    %v740 = vpop.trf.xlu0
    %v741 = vpop.trf.xlu0
    %v742 = vpop.trf.xlu0
    %v743 = vpop.trf.xlu0
    %v745 = vsel %vm464, %v736, 0
    %747 = vmatprep.subr.bf16.mxu0 0
    %748 = vmatpush1.bf16.msra.mxu0 0
    %749 = vmatprep.subr.bf16.mxu0 0
    %750 = vmatpush1.bf16.msra.mxu0 0
    %751 = vmatprep.subr.bf16.mxu0 0
    %752 = vmatpush1.bf16.msra.mxu0 0
    %753 = vmatprep.subr.bf16.mxu0 0
    %754 = vmatpush1.bf16.msra.mxu0 0
    %755 = vmatprep.subr.bf16.mxu0 0
    %756 = vmatpush1.bf16.msra.mxu0 %v725
    %757 = vmatprep.subr.bf16.mxu0 0
    %758 = vmatpush1.bf16.msra.mxu0 %v723
    %759 = vmatprep.subr.bf16.mxu0 0
    %760 = vmatpush1.bf16.msra.mxu0 %v713
    %761 = vmatprep.subr.bf16.mxu0 0
    %762 = vmatpush1.bf16.msra.mxu0 %v712
    %763 = vmatprep.subr.bf16.mxu0 0
    %764 = vmatpush2.bf16.msra.mxu0 0
    %765 = vmatprep.subr.bf16.mxu0 0
    %766 = vmatpush2.bf16.msra.mxu0 0
    %767 = vmatprep.subr.bf16.mxu0 0
    %768 = vmatpush2.bf16.msra.mxu0 0
    %769 = vmatprep.subr.bf16.mxu0 0
    %770 = vmatpush2.bf16.msra.mxu0 0
    %771 = vmatprep.subr.bf16.mxu0 0
    %772 = vmatpush2.bf16.msra.mxu0 0
    %773 = vmatprep.subr.bf16.mxu0 0
    %774 = vmatpush2.bf16.msra.mxu0 0
    %775 = vmatprep.subr.bf16.mxu0 0
    %776 = vmatpush2.bf16.msra.mxu0 0
    %777 = vmatprep.subr.bf16.mxu0 0
    %778 = vmatpush2.bf16.msra.mxu0 0
    %779 = vmatprep.mubr.bf16.mxu0 0
    %780 = vmatmul.mubr.bf16.gmra.mxu0 %v745
    %v781 = vpop.f32.mrf.mxu0
    %v782 = vadd.f32 0.0, %v781
    %v783 = vpop.f32.mrf.mxu0
    %v784 = vpop.f32.mrf.mxu0
    %v785 = vadd.f32 0.0, %v784
    %v786 = vpop.f32.mrf.mxu0
    %787 = vdwg.mxu0
    %v788 = vadd.f32 %v362, %v782
    %v789 = vadd.f32 %v363, %v785
    %v790 = vpack.c.bf16 %v789, %v788
    %v791 = vlaneseq
    %v792 = vshrl.u32 %v791, 7
    %v793 = vsub.s32 0, %v792
    %v794 = vrot.slane %v295, %v793
    %v796 = vsel %vm306, %v790, 0
    %798 = vmatprep.subr.bf16.mxu0 0
    %799 = vmatpush1.bf16.msra.mxu0 0
    %800 = vmatprep.subr.bf16.mxu0 0
    %801 = vmatpush1.bf16.msra.mxu0 0
    %802 = vmatprep.subr.bf16.mxu0 0
    %803 = vmatpush1.bf16.msra.mxu0 0
    %804 = vmatprep.subr.bf16.mxu0 0
    %805 = vmatpush1.bf16.msra.mxu0 0
    %806 = vmatprep.subr.bf16.mxu0 0
    %807 = vmatpush1.bf16.msra.mxu0 0
    %808 = vmatprep.subr.bf16.mxu0 0
    %809 = vmatpush1.bf16.msra.mxu0 0
    %810 = vmatprep.subr.bf16.mxu0 0
    %811 = vmatpush1.bf16.msra.mxu0 %v292
    %812 = vmatprep.subr.bf16.mxu0 0
    %813 = vmatpush1.bf16.msra.mxu0 %v291
    %814 = vmatprep.subr.bf16.mxu0 0
    %815 = vmatpush2.bf16.msra.mxu0 0
    %816 = vmatprep.subr.bf16.mxu0 0
    %817 = vmatpush2.bf16.msra.mxu0 0
    %818 = vmatprep.subr.bf16.mxu0 0
    %819 = vmatpush2.bf16.msra.mxu0 0
    %820 = vmatprep.subr.bf16.mxu0 0
    %821 = vmatpush2.bf16.msra.mxu0 0
    %822 = vmatprep.subr.bf16.mxu0 0
    %823 = vmatpush2.bf16.msra.mxu0 0
    %824 = vmatprep.subr.bf16.mxu0 0
    %825 = vmatpush2.bf16.msra.mxu0 0
    %826 = vmatprep.subr.bf16.mxu0 0
    %827 = vmatpush2.bf16.msra.mxu0 0
    %828 = vmatprep.subr.bf16.mxu0 0
    %829 = vmatpush2.bf16.msra.mxu0 0
    %830 = vmatprep.mubr.bf16.mxu0 0
    %831 = vmatmul.mubr.bf16.gmra.mxu0 %v796
    %v832 = vpop.f32.mrf.mxu0
    %v833 = vadd.f32 %v794, %v832
    %v834 = vpop.f32.mrf.mxu0
    %v835 = vpop.f32.mrf.mxu0
    %v836 = vadd.f32 %v794, %v835
    %v837 = vpop.f32.mrf.mxu0
    %838 = vdwg.mxu0
    %v839 = vsel %vm306, %v833, 0.0
    %v840 = vsel %vm306, %v836, 0.0
    %v841 = vadd.f32 %v839, %v840
    %v842 = vrot.slane %v841, 4
    %v843 = vadd.f32 %v841, %v842
    %v844 = vrot.slane %v843, 2
    %v845 = vadd.f32 %v843, %v844
    %v846 = vrot.slane %v845, 1
    %v847 = vadd.f32 %v845, %v846
    %v848 = vrcp.pop 16.0
    %v849 = vmul.f32 %v847, %v848
    %v850 = vmul.f32 %v833, %v833
    %v851 = vmul.f32 %v836, %v836
    %v852 = vsel %vm306, %v850, 0.0
    %v853 = vsel %vm306, %v851, 0.0
    %v854 = vadd.f32 %v852, %v853
    %v855 = vrot.slane %v854, 4
    %v856 = vadd.f32 %v854, %v855
    %v857 = vrot.slane %v856, 2
    %v858 = vadd.f32 %v856, %v857
    %v859 = vrot.slane %v858, 1
    %v860 = vadd.f32 %v858, %v859
    %v861 = vmul.f32 %v860, %v848
    %v862 = vmul.f32 %v849, %v849
    %v863 = vsub.f32 %v861, %v862
    %v864 = vmax.f32 %v863, 0.0
    %v865 = vadd.f32 %v864, 1e-05
    %v866 = vrsqrt.pop %v865
    %v867 = vmul.f32 %v295, %v866
    %v868 = vlaneseq
    %v869 = vshrl.u32 %v868, 7
    %v870 = vsub.s32 1, %v869
    %v871 = vrot.slane %v867, %v870
    %v872 = vmul.f32 %v833, %v871
    %v873 = vmul.f32 %v836, %v871
    %v874 = vmul.f32 %v849, %v867
    %v876 = vrot.slane %v874, 7
    %v878 = vsub.f32 %v295, %v876
    %v879 = vlaneseq
    %v880 = vshrl.u32 %v879, 7
    %v881 = vsub.s32 2, %v880
    %v882 = vrot.slane %v878, %v881
    %v883 = vadd.f32 %v872, %v882
    %v884 = vadd.f32 %v873, %v882
    %v885 = vmax.f32 %v883, 0.0
    %v886 = vmax.f32 %v884, 0.0
    %v887 = vadd.f32 %v362, %v885
    %v888 = vadd.f32 %v363, %v886
    %v889 = vpack.c.bf16 %v888, %v887
    %890 = vmatprep.subr.bf16.mxu0 0
    %891 = vmatpush1.bf16.msra.mxu0 0
    %892 = vmatprep.subr.bf16.mxu0 0
    %893 = vmatpush1.bf16.msra.mxu0 0
    %894 = vmatprep.subr.bf16.mxu0 0
    %895 = vmatpush1.bf16.msra.mxu0 0
    %896 = vmatprep.subr.bf16.mxu0 0
    %897 = vmatpush1.bf16.msra.mxu0 0
    %898 = vmatprep.subr.bf16.mxu0 0
    %899 = vmatpush1.bf16.msra.mxu0 0
    %900 = vmatprep.subr.bf16.mxu0 0
    %901 = vmatpush1.bf16.msra.mxu0 0
    %902 = vmatprep.subr.bf16.mxu0 0
    %903 = vmatpush1.bf16.msra.mxu0 0
    %904 = vmatprep.subr.bf16.mxu0 0
    %905 = vmatpush1.bf16.msra.mxu0 %v889
    %906 = vmatprep.subr.bf16.mxu0 0
    %907 = vmatpush2.bf16.msra.mxu0 0
    %908 = vmatprep.subr.bf16.mxu0 0
    %909 = vmatpush2.bf16.msra.mxu0 0
    %910 = vmatprep.subr.bf16.mxu0 0
    %911 = vmatpush2.bf16.msra.mxu0 0
    %912 = vmatprep.subr.bf16.mxu0 0
    %913 = vmatpush2.bf16.msra.mxu0 0
    %914 = vmatprep.subr.bf16.mxu0 0
    %915 = vmatpush2.bf16.msra.mxu0 0
    %916 = vmatprep.subr.bf16.mxu0 0
    %917 = vmatpush2.bf16.msra.mxu0 0
    %918 = vmatprep.subr.bf16.mxu0 0
    %919 = vmatpush2.bf16.msra.mxu0 0
    %920 = vmatprep.subr.bf16.mxu0 0
    %921 = vmatpush2.bf16.msra.mxu0 0
    %922 = vmatprep.mubr.bf16.mxu0 0
    %923 = vmatmul.mubr.bf16.gmra.mxu0 %v366
    %v924 = vpop.f32.mrf.mxu0
    %v925 = vadd.f32 0.0, %v924
    %v926 = vpop.f32.mrf.mxu0
    %v927 = vpop.f32.mrf.mxu0
    %v928 = vadd.f32 0.0, %v927
    %v929 = vpop.f32.mrf.mxu0
    %930 = vmatprep.mubr.bf16.mxu0 0
    %931 = vmatmul.mubr.bf16.gmra.mxu0 %v369
    %v932 = vpop.f32.mrf.mxu0
    %v933 = vadd.f32 0.0, %v932
    %v934 = vpop.f32.mrf.mxu0
    %v935 = vpop.f32.mrf.mxu0
    %v936 = vadd.f32 0.0, %v935
    %v937 = vpop.f32.mrf.mxu0
    %938 = vmatprep.mubr.bf16.mxu0 0
    %939 = vmatmul.mubr.bf16.gmra.mxu0 %v372
    %v940 = vpop.f32.mrf.mxu0
    %v941 = vadd.f32 0.0, %v940
    %v942 = vpop.f32.mrf.mxu0
    %v943 = vpop.f32.mrf.mxu0
    %v944 = vadd.f32 0.0, %v943
    %v945 = vpop.f32.mrf.mxu0
    %946 = vmatprep.mubr.bf16.mxu0 0
    %947 = vmatmul.mubr.bf16.gmra.mxu0 %v375
    %v948 = vpop.f32.mrf.mxu0
    %v949 = vadd.f32 0.0, %v948
    %v950 = vpop.f32.mrf.mxu0
    %v951 = vpop.f32.mrf.mxu0
    %v952 = vadd.f32 0.0, %v951
    %v953 = vpop.f32.mrf.mxu0
    %954 = vdwg.mxu0
    %959 = vrot.lane.b32.xlu0 %v941, 32
    %v960 = vpop.permute.xlu0 %959
    %961 = vrot.lane.b32.xlu0 %v944, 32
    %v962 = vpop.permute.xlu0 %961
    %963 = vrot.lane.b32.xlu0 %v949, 32
    %v964 = vpop.permute.xlu0 %963
    %965 = vrot.lane.b32.xlu0 %v952, 32
    %v966 = vpop.permute.xlu0 %965
    %v971 = vsel %vm306, %v925, %v960
    %v972 = vsel %vm306, %v928, %v962
    %v973 = vsel %vm306, %v933, %v964
    %v974 = vsel %vm306, %v936, %v966
    %v975 = vpack.c.bf16 %v972, %v971
    %v976 = vpack.c.bf16 %v974, %v973
    %v978 = vsel %vm464, %v975, 0
    %v981 = vsel %vm464, %v976, 0
    %983 = vmatprep.subr.bf16.mxu0 0
    %984 = vmatpush1.bf16.msra.mxu0 0
    %985 = vmatprep.subr.bf16.mxu0 0
    %986 = vmatpush1.bf16.msra.mxu0 0
    %987 = vmatprep.subr.bf16.mxu0 0
    %988 = vmatpush1.bf16.msra.mxu0 0
    %989 = vmatprep.subr.bf16.mxu0 0
    %990 = vmatpush1.bf16.msra.mxu0 0
    %991 = vmatprep.subr.bf16.mxu0 0
    %992 = vmatpush1.bf16.msra.mxu0 %v268
    %993 = vmatprep.subr.bf16.mxu0 0
    %994 = vmatpush1.bf16.msra.mxu0 %v267
    %995 = vmatprep.subr.bf16.mxu0 0
    %996 = vmatpush1.bf16.msra.mxu0 %v266
    %997 = vmatprep.subr.bf16.mxu0 0
    %998 = vmatpush1.bf16.msra.mxu0 %v265
    %999 = vmatprep.subr.bf16.mxu0 0
    %1000 = vmatpush2.bf16.msra.mxu0 0
    %1001 = vmatprep.subr.bf16.mxu0 0
    %1002 = vmatpush2.bf16.msra.mxu0 0
    %1003 = vmatprep.subr.bf16.mxu0 0
    %1004 = vmatpush2.bf16.msra.mxu0 0
    %1005 = vmatprep.subr.bf16.mxu0 0
    %1006 = vmatpush2.bf16.msra.mxu0 0
    %1007 = vmatprep.subr.bf16.mxu0 0
    %1008 = vmatpush2.bf16.msra.mxu0 0
    %1009 = vmatprep.subr.bf16.mxu0 0
    %1010 = vmatpush2.bf16.msra.mxu0 0
    %1011 = vmatprep.subr.bf16.mxu0 0
    %1012 = vmatpush2.bf16.msra.mxu0 0
    %1013 = vmatprep.subr.bf16.mxu0 0
    %1014 = vmatpush2.bf16.msra.mxu0 0
    %1015 = vmatprep.mubr.bf16.mxu0 0
    %1016 = vmatmul.mubr.bf16.gmra.mxu0 %v978
    %v1017 = vpop.f32.mrf.mxu0
    %v1018 = vadd.f32 %v348, %v1017
    %v1019 = vpop.f32.mrf.mxu0
    %v1020 = vpop.f32.mrf.mxu0
    %v1021 = vadd.f32 %v351, %v1020
    %v1022 = vpop.f32.mrf.mxu0
    %1023 = vmatprep.mubr.bf16.mxu0 0
    %1024 = vmatmul.mubr.bf16.gmra.mxu0 %v981
    %v1025 = vpop.f32.mrf.mxu0
    %v1026 = vadd.f32 %v356, %v1025
    %v1027 = vpop.f32.mrf.mxu0
    %v1028 = vpop.f32.mrf.mxu0
    %v1029 = vadd.f32 %v359, %v1028
    %v1030 = vpop.f32.mrf.mxu0
    %1031 = vdwg.mxu0
    %v1032 = vsel %vm464, %v1018, 0.0
    %v1033 = vsel %vm464, %v1021, 0.0
    %v1034 = vadd.f32 %v1032, %v1033
    %v1035 = vsel %vm464, %v1026, 0.0
    %v1036 = vadd.f32 %v1034, %v1035
    %v1037 = vsel %vm464, %v1029, 0.0
    %v1038 = vadd.f32 %v1036, %v1037
    %v1039 = vrot.slane %v1038, 4
    %v1040 = vadd.f32 %v1038, %v1039
    %v1041 = vrot.slane %v1040, 2
    %v1042 = vadd.f32 %v1040, %v1041
    %v1043 = vrot.slane %v1042, 1
    %v1044 = vadd.f32 %v1042, %v1043
    %v1045 = vmul.f32 %v1044, %v533
    %v1046 = vmul.f32 %v1018, %v1018
    %v1047 = vmul.f32 %v1021, %v1021
    %v1048 = vmul.f32 %v1026, %v1026
    %v1049 = vmul.f32 %v1029, %v1029
    %v1050 = vsel %vm464, %v1046, 0.0
    %v1051 = vsel %vm464, %v1047, 0.0
    %v1052 = vadd.f32 %v1050, %v1051
    %v1053 = vsel %vm464, %v1048, 0.0
    %v1054 = vadd.f32 %v1052, %v1053
    %v1055 = vsel %vm464, %v1049, 0.0
    %v1056 = vadd.f32 %v1054, %v1055
    %v1057 = vrot.slane %v1056, 4
    %v1058 = vadd.f32 %v1056, %v1057
    %v1059 = vrot.slane %v1058, 2
    %v1060 = vadd.f32 %v1058, %v1059
    %v1061 = vrot.slane %v1060, 1
    %v1062 = vadd.f32 %v1060, %v1061
    %v1063 = vmul.f32 %v1062, %v533
    %v1064 = vmul.f32 %v1045, %v1045
    %v1065 = vsub.f32 %v1063, %v1064
    %v1066 = vmax.f32 %v1065, 0.0
    %v1067 = vadd.f32 %v1066, 1e-05
    %v1068 = vrsqrt.pop %v1067
    %v1069 = vmul.f32 %v293, %v1068
    %v1070 = vlaneseq
    %v1071 = vshrl.u32 %v1070, 7
    %v1072 = vsub.s32 1, %v1071
    %v1073 = vrot.slane %v1069, %v1072
    %v1074 = vmul.f32 %v1018, %v1073
    %v1075 = vmul.f32 %v1021, %v1073
    %v1076 = vmul.f32 %v1026, %v1073
    %v1077 = vmul.f32 %v1029, %v1073
    %v1078 = vmul.f32 %v1045, %v1069
    %v1080 = vrot.slane %v1078, 7
    %v1082 = vsub.f32 %v293, %v1080
    %v1083 = vlaneseq
    %v1084 = vshrl.u32 %v1083, 7
    %v1085 = vsub.s32 2, %v1084
    %v1086 = vrot.slane %v1082, %v1085
    %v1087 = vadd.f32 %v1074, %v1086
    %v1088 = vadd.f32 %v1075, %v1086
    %v1089 = vadd.f32 %v1076, %v1086
    %v1090 = vadd.f32 %v1077, %v1086
    %v1091 = vmax.f32 %v1087, 0.0
    %v1092 = vmax.f32 %v1088, 0.0
    %v1093 = vmax.f32 %v1089, 0.0
    %v1094 = vmax.f32 %v1090, 0.0
    %v1095 = vpack.c.bf16 %v1092, %v1091
    %v1096 = vpack.c.bf16 %v1094, %v1093
    %v1098 = vsel %vm464, %v1095, 0
    %v1101 = vsel %vm464, %v1096, 0
    %1103 = vmatprep.subr.bf16.mxu0 0
    %1104 = vmatpush1.bf16.msra.mxu0 0
    %1105 = vmatprep.subr.bf16.mxu0 0
    %1106 = vmatpush1.bf16.msra.mxu0 0
    %1107 = vmatprep.subr.bf16.mxu0 0
    %1108 = vmatpush1.bf16.msra.mxu0 0
    %1109 = vmatprep.subr.bf16.mxu0 0
    %1110 = vmatpush1.bf16.msra.mxu0 0
    %1111 = vmatprep.subr.bf16.mxu0 0
    %1112 = vmatpush1.bf16.msra.mxu0 %v286
    %1113 = vmatprep.subr.bf16.mxu0 0
    %1114 = vmatpush1.bf16.msra.mxu0 %v285
    %1115 = vmatprep.subr.bf16.mxu0 0
    %1116 = vmatpush1.bf16.msra.mxu0 %v284
    %1117 = vmatprep.subr.bf16.mxu0 0
    %1118 = vmatpush1.bf16.msra.mxu0 %v283
    %1119 = vmatprep.subr.bf16.mxu0 0
    %1120 = vmatpush2.bf16.msra.mxu0 0
    %1121 = vmatprep.subr.bf16.mxu0 0
    %1122 = vmatpush2.bf16.msra.mxu0 0
    %1123 = vmatprep.subr.bf16.mxu0 0
    %1124 = vmatpush2.bf16.msra.mxu0 0
    %1125 = vmatprep.subr.bf16.mxu0 0
    %1126 = vmatpush2.bf16.msra.mxu0 0
    %1127 = vmatprep.subr.bf16.mxu0 0
    %1128 = vmatpush2.bf16.msra.mxu0 0
    %1129 = vmatprep.subr.bf16.mxu0 0
    %1130 = vmatpush2.bf16.msra.mxu0 0
    %1131 = vmatprep.subr.bf16.mxu0 0
    %1132 = vmatpush2.bf16.msra.mxu0 0
    %1133 = vmatprep.subr.bf16.mxu0 0
    %1134 = vmatpush2.bf16.msra.mxu0 0
    %1135 = vmatprep.mubr.bf16.mxu0 0
    %1136 = vmatmul.mubr.bf16.gmra.mxu0 %v1098
    %v1137 = vpop.f32.mrf.mxu0
    %v1138 = vadd.f32 %v589, %v1137
    %v1139 = vpop.f32.mrf.mxu0
    %v1140 = vpop.f32.mrf.mxu0
    %v1141 = vadd.f32 %v589, %v1140
    %v1142 = vpop.f32.mrf.mxu0
    %1143 = vmatprep.mubr.bf16.mxu0 0
    %1144 = vmatmul.mubr.bf16.gmra.mxu0 %v1101
    %v1145 = vpop.f32.mrf.mxu0
    %v1146 = vadd.f32 %v589, %v1145
    %v1147 = vpop.f32.mrf.mxu0
    %v1148 = vpop.f32.mrf.mxu0
    %v1149 = vadd.f32 %v589, %v1148
    %v1150 = vpop.f32.mrf.mxu0
    %1151 = vdwg.mxu0
    %v1152 = vsel %vm464, %v1138, 0.0
    %v1153 = vsel %vm464, %v1141, 0.0
    %v1154 = vadd.f32 %v1152, %v1153
    %v1155 = vsel %vm464, %v1146, 0.0
    %v1156 = vadd.f32 %v1154, %v1155
    %v1157 = vsel %vm464, %v1149, 0.0
    %v1158 = vadd.f32 %v1156, %v1157
    %v1159 = vrot.slane %v1158, 4
    %v1160 = vadd.f32 %v1158, %v1159
    %v1161 = vrot.slane %v1160, 2
    %v1162 = vadd.f32 %v1160, %v1161
    %v1163 = vrot.slane %v1162, 1
    %v1164 = vadd.f32 %v1162, %v1163
    %v1165 = vmul.f32 %v1164, %v533
    %v1166 = vmul.f32 %v1138, %v1138
    %v1167 = vmul.f32 %v1141, %v1141
    %v1168 = vmul.f32 %v1146, %v1146
    %v1169 = vmul.f32 %v1149, %v1149
    %v1170 = vsel %vm464, %v1166, 0.0
    %v1171 = vsel %vm464, %v1167, 0.0
    %v1172 = vadd.f32 %v1170, %v1171
    %v1173 = vsel %vm464, %v1168, 0.0
    %v1174 = vadd.f32 %v1172, %v1173
    %v1175 = vsel %vm464, %v1169, 0.0
    %v1176 = vadd.f32 %v1174, %v1175
    %v1177 = vrot.slane %v1176, 4
    %v1178 = vadd.f32 %v1176, %v1177
    %v1179 = vrot.slane %v1178, 2
    %v1180 = vadd.f32 %v1178, %v1179
    %v1181 = vrot.slane %v1180, 1
    %v1182 = vadd.f32 %v1180, %v1181
    %v1183 = vmul.f32 %v1182, %v533
    %v1184 = vmul.f32 %v1165, %v1165
    %v1185 = vsub.f32 %v1183, %v1184
    %v1186 = vmax.f32 %v1185, 0.0
    %v1187 = vadd.f32 %v1186, 1e-05
    %v1188 = vrsqrt.pop %v1187
    %v1189 = vmul.f32 %v294, %v1188
    %v1190 = vlaneseq
    %v1191 = vshrl.u32 %v1190, 7
    %v1192 = vsub.s32 1, %v1191
    %v1193 = vrot.slane %v1189, %v1192
    %v1194 = vmul.f32 %v1138, %v1193
    %v1195 = vmul.f32 %v1141, %v1193
    %v1196 = vmul.f32 %v1146, %v1193
    %v1197 = vmul.f32 %v1149, %v1193
    %v1198 = vmul.f32 %v1165, %v1189
    %v1200 = vrot.slane %v1198, 7
    %v1202 = vsub.f32 %v294, %v1200
    %v1203 = vlaneseq
    %v1204 = vshrl.u32 %v1203, 7
    %v1205 = vsub.s32 2, %v1204
    %v1206 = vrot.slane %v1202, %v1205
    %v1207 = vadd.f32 %v1194, %v1206
    %v1208 = vadd.f32 %v1195, %v1206
    %v1209 = vadd.f32 %v1196, %v1206
    %v1210 = vadd.f32 %v1197, %v1206
    %v1211 = vmax.f32 %v1207, 0.0
    %v1212 = vmax.f32 %v1208, 0.0
    %v1213 = vmax.f32 %v1209, 0.0
    %v1214 = vmax.f32 %v1210, 0.0
    %v1215 = vmul.f32 %v1211, %v231
    %v1216 = vmul.f32 %v1212, %v234
    %v1217 = vmul.f32 %v1213, %v237
    %v1218 = vmul.f32 %v1214, %v240
    %v1219 = vpack.c.bf16 %v1216, %v1215
    %v1220 = vpack.c.bf16 %v1218, %v1217
    %v1221 = vmul.f32 %v1211, %v247
    %v1222 = vmul.f32 %v1212, %v250
    %v1223 = vmul.f32 %v1213, %v253
    %v1224 = vmul.f32 %v1214, %v256
    %v1225 = vpack.c.bf16 %v1222, %v1221
    %v1226 = vpack.c.bf16 %v1224, %v1223
    %1229 = vrot.lane.b32.xlu0 %v1225, 96
    %v1230 = vpop.permute.xlu0 %1229
    %1231 = vrot.lane.b32.xlu0 %v1226, 96
    %v1232 = vpop.permute.xlu0 %1231
    %1235 = vmatprep.subr.bf16.mxu0 0
    %1236 = vmatpush1.bf16.msra.mxu0 0
    %1237 = vmatprep.subr.bf16.mxu0 0
    %1238 = vmatpush1.bf16.msra.mxu0 0
    %1239 = vmatprep.subr.bf16.mxu0 0
    %1240 = vmatpush1.bf16.msra.mxu0 0
    %1241 = vmatprep.subr.bf16.mxu0 0
    %1242 = vmatpush1.bf16.msra.mxu0 0
    %1243 = vmatprep.subr.bf16.mxu0 0
    %1244 = vmatpush1.bf16.msra.mxu0 %v1232
    %1245 = vmatprep.subr.bf16.mxu0 0
    %1246 = vmatpush1.bf16.msra.mxu0 %v1230
    %1247 = vmatprep.subr.bf16.mxu0 0
    %1248 = vmatpush1.bf16.msra.mxu0 %v1220
    %1249 = vmatprep.subr.bf16.mxu0 0
    %1250 = vmatpush1.bf16.msra.mxu0 %v1219
    %1251 = vmatprep.subr.bf16.mxu0 0
    %1252 = vmatpush2.bf16.msra.mxu0 0
    %1253 = vmatprep.subr.bf16.mxu0 0
    %1254 = vmatpush2.bf16.msra.mxu0 0
    %1255 = vmatprep.subr.bf16.mxu0 0
    %1256 = vmatpush2.bf16.msra.mxu0 0
    %1257 = vmatprep.subr.bf16.mxu0 0
    %1258 = vmatpush2.bf16.msra.mxu0 0
    %1259 = vmatprep.subr.bf16.mxu0 0
    %1260 = vmatpush2.bf16.msra.mxu0 0
    %1261 = vmatprep.subr.bf16.mxu0 0
    %1262 = vmatpush2.bf16.msra.mxu0 0
    %1263 = vmatprep.subr.bf16.mxu0 0
    %1264 = vmatpush2.bf16.msra.mxu0 0
    %1265 = vmatprep.subr.bf16.mxu0 0
    %1266 = vmatpush2.bf16.msra.mxu0 0
    %1267 = vmatprep.mubr.bf16.mxu0 0
    %1268 = vmatmul.mubr.bf16.gmra.mxu0 %v745
    %v1269 = vpop.f32.mrf.mxu0
    %v1270 = vadd.f32 0.0, %v1269
    %v1271 = vpop.f32.mrf.mxu0
    %v1272 = vpop.f32.mrf.mxu0
    %v1273 = vadd.f32 0.0, %v1272
    %v1274 = vpop.f32.mrf.mxu0
    %1275 = vdwg.mxu0
    %v1276 = vadd.f32 %v887, %v1270
    %v1277 = vadd.f32 %v888, %v1273
    %v1278 = vpack.c.bf16 %v1277, %v1276
    %v1280 = vsel %vm306, %v1278, 0
    %1282 = vmatprep.subr.bf16.mxu0 0
    %1283 = vmatpush1.bf16.msra.mxu0 0
    %1284 = vmatprep.subr.bf16.mxu0 0
    %1285 = vmatpush1.bf16.msra.mxu0 0
    %1286 = vmatprep.subr.bf16.mxu0 0
    %1287 = vmatpush1.bf16.msra.mxu0 0
    %1288 = vmatprep.subr.bf16.mxu0 0
    %1289 = vmatpush1.bf16.msra.mxu0 0
    %1290 = vmatprep.subr.bf16.mxu0 0
    %1291 = vmatpush1.bf16.msra.mxu0 0
    %1292 = vmatprep.subr.bf16.mxu0 0
    %1293 = vmatpush1.bf16.msra.mxu0 0
    %1294 = vmatprep.subr.bf16.mxu0 0
    %1295 = vmatpush1.bf16.msra.mxu0 %v292
    %1296 = vmatprep.subr.bf16.mxu0 0
    %1297 = vmatpush1.bf16.msra.mxu0 %v291
    %1298 = vmatprep.subr.bf16.mxu0 0
    %1299 = vmatpush2.bf16.msra.mxu0 0
    %1300 = vmatprep.subr.bf16.mxu0 0
    %1301 = vmatpush2.bf16.msra.mxu0 0
    %1302 = vmatprep.subr.bf16.mxu0 0
    %1303 = vmatpush2.bf16.msra.mxu0 0
    %1304 = vmatprep.subr.bf16.mxu0 0
    %1305 = vmatpush2.bf16.msra.mxu0 0
    %1306 = vmatprep.subr.bf16.mxu0 0
    %1307 = vmatpush2.bf16.msra.mxu0 0
    %1308 = vmatprep.subr.bf16.mxu0 0
    %1309 = vmatpush2.bf16.msra.mxu0 0
    %1310 = vmatprep.subr.bf16.mxu0 0
    %1311 = vmatpush2.bf16.msra.mxu0 0
    %1312 = vmatprep.subr.bf16.mxu0 0
    %1313 = vmatpush2.bf16.msra.mxu0 0
    %1314 = vmatprep.mubr.bf16.mxu0 0
    %1315 = vmatmul.mubr.bf16.gmra.mxu0 %v1280
    %v1316 = vpop.f32.mrf.mxu0
    %v1317 = vadd.f32 %v794, %v1316
    %v1318 = vpop.f32.mrf.mxu0
    %v1319 = vpop.f32.mrf.mxu0
    %v1320 = vadd.f32 %v794, %v1319
    %v1321 = vpop.f32.mrf.mxu0
    %1322 = vdwg.mxu0
    %v1323 = vsel %vm306, %v1317, 0.0
    %v1324 = vsel %vm306, %v1320, 0.0
    %v1325 = vadd.f32 %v1323, %v1324
    %v1326 = vrot.slane %v1325, 4
    %v1327 = vadd.f32 %v1325, %v1326
    %v1328 = vrot.slane %v1327, 2
    %v1329 = vadd.f32 %v1327, %v1328
    %v1330 = vrot.slane %v1329, 1
    %v1331 = vadd.f32 %v1329, %v1330
    %v1332 = vmul.f32 %v1331, %v848
    %v1333 = vmul.f32 %v1317, %v1317
    %v1334 = vmul.f32 %v1320, %v1320
    %v1335 = vsel %vm306, %v1333, 0.0
    %v1336 = vsel %vm306, %v1334, 0.0
    %v1337 = vadd.f32 %v1335, %v1336
    %v1338 = vrot.slane %v1337, 4
    %v1339 = vadd.f32 %v1337, %v1338
    %v1340 = vrot.slane %v1339, 2
    %v1341 = vadd.f32 %v1339, %v1340
    %v1342 = vrot.slane %v1341, 1
    %v1343 = vadd.f32 %v1341, %v1342
    %v1344 = vmul.f32 %v1343, %v848
    %v1345 = vmul.f32 %v1332, %v1332
    %v1346 = vsub.f32 %v1344, %v1345
    %v1347 = vmax.f32 %v1346, 0.0
    %v1348 = vadd.f32 %v1347, 1e-05
    %v1349 = vrsqrt.pop %v1348
    %v1350 = vmul.f32 %v295, %v1349
    %v1351 = vlaneseq
    %v1352 = vshrl.u32 %v1351, 7
    %v1353 = vsub.s32 1, %v1352
    %v1354 = vrot.slane %v1350, %v1353
    %v1355 = vmul.f32 %v1317, %v1354
    %v1356 = vmul.f32 %v1320, %v1354
    %v1357 = vmul.f32 %v1332, %v1350
    %v1359 = vrot.slane %v1357, 7
    %v1361 = vsub.f32 %v295, %v1359
    %v1362 = vlaneseq
    %v1363 = vshrl.u32 %v1362, 7
    %v1364 = vsub.s32 2, %v1363
    %v1365 = vrot.slane %v1361, %v1364
    %v1366 = vadd.f32 %v1355, %v1365
    %v1367 = vadd.f32 %v1356, %v1365
    %v1368 = vmax.f32 %v1366, 0.0
    %v1369 = vmax.f32 %v1367, 0.0
    %v1370 = vadd.f32 %v887, %v1368
    %v1371 = vadd.f32 %v888, %v1369
    %v1372 = vld [vmem:[%s1] sm:$0xff]
    %v1373 = vld [vmem:[%s1 + $0x8] sm:$0xff]
    %vm1374 = vcmp.eq.s32.totalorder %v1372, 0
    %vm1375 = vcmp.eq.s32.totalorder %v1373, 0
    %v1376 = vsel %vm1374, 1, 0
    %v1377 = vsel %vm1375, 1, 0
    %1378 = vset.pattern.permute.xlu0 0
    %1379 = vperm.xlu0 %1378, %v1376
    %v1380 = vpop.permute.xlu0 %1379
    %1381 = vset.pattern.permute.xlu0 0
    %1382 = vperm.xlu0 %1381, %v1377
    %v1383 = vpop.permute.xlu0 %1382
    %vm1384 = vcmp.eq.s32.totalorder %v1380, 1
    %vm1385 = vcmp.eq.s32.totalorder %v1383, 1
    %v1386 = vsel %vm1384, %v1370, -3.4028235e+38
    %v1387 = vsel %vm1385, %v1371, -3.4028235e+38
    %v1388 = vsel %vm306, %v1386, -inf
    %v1389 = vsel %vm306, %v1387, -inf
    %v1390 = vmax.f32 %v1388, %v1389
    %v1391 = vrot.slane %v1390, 4
    %v1392 = vmax.f32 %v1390, %v1391
    %v1393 = vrot.slane %v1392, 2
    %v1394 = vmax.f32 %v1392, %v1393
    %v1395 = vrot.slane %v1394, 1
    %v1396 = vmax.f32 %v1394, %v1395
    %vm1397 = vcmp.eq.s32.totalorder %v1372, 1
    %vm1398 = vcmp.eq.s32.totalorder %v1373, 1
    %v1399 = vsel %vm1397, 1, 0
    %v1400 = vsel %vm1398, 1, 0
    %1401 = vset.pattern.permute.xlu0 0
    %1402 = vperm.xlu0 %1401, %v1399
    %v1403 = vpop.permute.xlu0 %1402
    %1404 = vset.pattern.permute.xlu0 0
    %1405 = vperm.xlu0 %1404, %v1400
    %v1406 = vpop.permute.xlu0 %1405
    %vm1407 = vcmp.eq.s32.totalorder %v1403, 1
    %vm1408 = vcmp.eq.s32.totalorder %v1406, 1
    %v1409 = vsel %vm1407, %v1370, -3.4028235e+38
    %v1410 = vsel %vm1408, %v1371, -3.4028235e+38
    %v1411 = vsel %vm306, %v1409, -inf
    %v1412 = vsel %vm306, %v1410, -inf
    %v1413 = vmax.f32 %v1411, %v1412
    %v1414 = vrot.slane %v1413, 4
    %v1415 = vmax.f32 %v1413, %v1414
    %v1416 = vrot.slane %v1415, 2
    %v1417 = vmax.f32 %v1415, %v1416
    %v1418 = vrot.slane %v1417, 1
    %v1419 = vmax.f32 %v1417, %v1418
    %vm1420 = vcmask 1040384
    %v1421 = vsel %vm1420, %v1396, %v1419
    %vm1422 = vcmask 254976
    %1423 = vst.msk [vmem:[#allocation13] sm:$0x3] %vm1422, %v1421
    // Predicated region
    $region70: #{tpu_custom_call.1} parent=1 // pred_check
      _
    $region71: #{tpu_custom_call.1} parent=1 // pred_check_branch
      %1425 = sbr.rel (0) target = $region73
    $region72: #{tpu_custom_call.1} parent=1 // pred_region
      %s1427 = ssub.s32 32, 32
      %1428 = vsyncadd [#allocation4], %s1427
      %s1430 = sshll.u32 [#allocation13], 4
      %s1431 = int_to_ptr.vmem [resolvable:$true] %s1430
      %1433 = dma.vmem_to_hbm [thread:$0]  %s1431, 32, %s11, [#allocation4]
    $region73: #{tpu_custom_call.1} parent=1 // pred_fallthru
      _
    // Predicated region
    $region74: #{tpu_custom_call.1} parent=1 // pred_check
      _
    $region75: #{tpu_custom_call.1} parent=1 // pred_check_branch
      %1435 = sbr.rel (0) target = $region77
    $region76: #{tpu_custom_call.1} parent=1 // pred_region
      %1436 = dma.done [#allocation4], 32
    $region77: #{tpu_custom_call.1} parent=1 // pred_fallthru
      _
    %1437 = vsyncpa [#allocation3], 1
    %1438 = vsyncpa [#allocation6], 1
    %1439 = vsyncpa [#allocation9], 1
    %1440 = vsyncpa [#allocation12], 1
    %1441 = vsyncpa [#allocation4], 1

</llo_original>
